<compile_context>
chip_gen: v5e
topology: v5e:2x2
jax: 0.10.0
libtpu: 0.0.40
codegen_flags: <defaults>
</compile_context>

<pallas_src>
import functools
import math

import jax
import jax.numpy as jnp
from jax.experimental import pallas as pl
from jax.experimental.pallas import tpu as pltpu


# ---------------------------------------------------------------------------
# Fused EncoderBlock kernel: attention + LN1 + FFN + LN2, one batch tile/step
# ---------------------------------------------------------------------------
def _encoder_block_kernel(bt, seq, emb, heads, head_dim, ffn, ffn_tile,
                          mask_neg, cdt, approx,
                          x_ref, mask_ref,
                          wq_ref, wk_ref, wv_ref, wo_ref, bo_ref,
                          g1_ref, be1_ref,
                          w1_ref, bf1_ref, w2_ref, bf2_ref,
                          g2_ref, be2_ref,
                          out_ref):
    m_rows = bt * seq

    xc = x_ref[...].reshape(m_rows, emb)          # activations already in cdt
    x2 = xc.astype(jnp.float32)                   # f32 residual path

    # ---- multi-head self-attention --------------------------------------
    # Full lane-width projections (all heads at once; block-diagonal weights,
    # 1/sqrt(E) folded into Wq at pack time).  Cast to cdt immediately so no
    # extra f32 copies stay live alongside q3/k3/v3.
    q3 = jnp.dot(xc, wq_ref[...], preferred_element_type=jnp.float32
                 ).astype(cdt).reshape(bt, seq, emb)
    k3 = jnp.dot(xc, wk_ref[...], preferred_element_type=jnp.float32
                 ).astype(cdt).reshape(bt, seq, emb)
    v3 = jnp.dot(xc, wv_ref[...], preferred_element_type=jnp.float32
                 ).astype(cdt).reshape(bt, seq, emb)

    # Additive key-padding bias from the compact (bt, 1, L) mask (VPU work;
    # replaces the dense (bt, L, L) mask DMA of the previous version).
    mask_bias = jnp.where(mask_ref[...] == 0,
                          jnp.float32(mask_neg), jnp.float32(0.0))   # (bt,1,L)

    # TODO(synk): for long sequences (L >~ 2K) switch to a flash-style
    #             key-block loop with online softmax instead of materializing
    #             the full (bt, L, L) scores per head.
    ctx_heads = []
    for h in range(heads):                 # static unroll; heads is small here
        lo = h * head_dim
        qh = q3[:, :, lo:lo + head_dim]
        kh = k3[:, :, lo:lo + head_dim]
        vh = v3[:, :, lo:lo + head_dim]

        s = jnp.einsum('bqd,bkd->bqk', qh, kh,
                       preferred_element_type=jnp.float32)       # (bt,L,L) f32
        logits = s + mask_bias
        mx = jnp.max(logits, axis=-1, keepdims=True)
        p = jnp.exp(logits - mx)
        denom = jnp.sum(p, axis=-1, keepdims=True)
        attn = (p * pl.reciprocal(denom, approx=approx)).astype(cdt)

        ctx_heads.append(
            jnp.einsum('bqk,bkd->bqd', attn, vh,
                       preferred_element_type=jnp.float32).astype(cdt))

    # Concat heads once -> single K = E output projection (full MXU depth).
    ctx = jnp.concatenate(ctx_heads, axis=-1).reshape(m_rows, emb)
    attn_out = jnp.dot(ctx, wo_ref[...],
                       preferred_element_type=jnp.float32) + bo_ref[...]

    # ---- residual + LayerNorm + feed-forward + residual + LayerNorm ------
    def _layer_norm(y, g, b):
        mu = jnp.mean(y, axis=-1, keepdims=True)
        yc = y - mu
        var = jnp.mean(yc * yc, axis=-1, keepdims=True)
        return yc * jax.lax.rsqrt(var + 1e-5) * g + b

    h1 = _layer_norm(attn_out + x2, g1_ref[...], be1_ref[...])
    h1c = h1.astype(cdt)
    # dropout: eval-mode identity

    # FFN hidden dim in static chunks (bounds the live f32 activation).
    y = jnp.zeros((m_rows, emb), jnp.float32)
    for j0 in range(0, ffn, ffn_tile):
        j1 = min(ffn, j0 + ffn_tile)
        f = jnp.dot(h1c, w1_ref[:, j0:j1],
                    preferred_element_type=jnp.float32) + bf1_ref[:, j0:j1]
        f = jnp.maximum(f, 0.0)
        y = y + jnp.dot(f.astype(cdt), w2_ref[j0:j1, :],
                        preferred_element_type=jnp.float32)
    y = y + bf2_ref[...]

    h2 = _layer_norm(y + h1, g2_ref[...], be2_ref[...])
    # TODO(synk): for emb not a multiple of 128 a flattened (bt, 1, seq*emb)
    #             output slab would give lane-dense (unmasked) stores.
    out_ref[...] = h2.reshape(bt, seq, emb).astype(out_ref.dtype)


# ---------------------------------------------------------------------------
# VMEM-budget / tile heuristics
# ---------------------------------------------------------------------------
def _vmem_capacity_bytes():
    try:
        return int(pltpu.get_tpu_info().vmem_capacity_bytes)
    except Exception:
        return 64 * 1024 * 1024          # conservative (v7x per-TC VMEM)


def _vmem_bytes_estimate(bt, seq, emb, ffn, ffn_tile, act_bytes, cdt_bytes):
    m = bt * seq
    # double-buffered gridded operands (x, out, compact mask)
    est = 2 * 2 * (bt * seq * emb * act_bytes) + 2 * (bt * seq * 4)
    # single-buffered resident weights / biases / LN params
    est += (4 * emb * emb + 2 * emb * ffn) * cdt_bytes
    est += (6 * emb + ffn) * 4
    # rough bound on live in-kernel intermediates
    est += m * emb * 4 * 6               # f32 residual / attn_out / h1 / y / temps
    est += m * emb * cdt_bytes * 5       # q/k/v/ctx/h1c in compute dtype
    est += bt * seq * seq * 4 * 3        # per-head score / prob tiles
    est += m * ffn_tile * 4              # FFN activation chunk
    return est


def _choose_batch_tile(n, seq, est_fn, budget):
    divisors = [d for d in range(1, n + 1) if n % d == 0]
    fitting = [d for d in divisors if est_fn(d) <= budget] or [1]

    def score(bt):
        m = bt * seq
        # Prefer MXU-filling M (256 on v6e/v7x, 128 on v5e), then >= 2 grid
        # steps so both v7x TensorCores get work, then the biggest tile.
        return ((m % 256 == 0), (m % 128 == 0), (n // bt >= 2), bt)

    return max(fitting, key=score)


# ---------------------------------------------------------------------------
# One-time weight packing (hoisted out of the per-forward path)
# ---------------------------------------------------------------------------
def pack_encoder_params(params, *, heads, compute_dtype=jnp.bfloat16):
    emb = params['word_embedding'].shape[1]
    head_dim = emb // heads
    scale = 1.0 / math.sqrt(emb)
    eye = jnp.eye(heads, dtype=jnp.float32)
    layers = []
    for lp in params['layers']:
        ffn = lp['w1'].shape[0]
        layers.append({
            # Block-diagonal per-head projections -> one full lane-width
            # matmul per Q/K/V.  (Note: for very large head counts this does
            # H x the true per-head FLOPs; fine for small/medium H.)
            # 1/sqrt(E) softmax scale is folded into Wq here.
            'wq_bd': (jnp.kron(eye, lp['wq'].T) * scale).astype(compute_dtype),
            'wk_bd': jnp.kron(eye, lp['wk'].T).astype(compute_dtype),
            'wv_bd': jnp.kron(eye, lp['wv'].T).astype(compute_dtype),
            'wo_t': lp['wo'].T.astype(compute_dtype),
            'bo': lp['bo'].reshape(1, emb).astype(jnp.float32),
            'g1': lp['ln1_g'].reshape(1, emb).astype(jnp.float32),
            'be1': lp['ln1_b'].reshape(1, emb).astype(jnp.float32),
            'w1_t': lp['w1'].T.astype(compute_dtype),
            'b1': lp['b1'].reshape(1, ffn).astype(jnp.float32),
            'w2_t': lp['w2'].T.astype(compute_dtype),
            'b2': lp['b2'].reshape(1, emb).astype(jnp.float32),
            'g2': lp['ln2_g'].reshape(1, emb).astype(jnp.float32),
            'be2': lp['ln2_b'].reshape(1, emb).astype(jnp.float32),
        })
    return {
        'word_embedding': params['word_embedding'],
        'position_embedding': params['position_embedding'],
        'layers': layers,
        'heads': heads,
        'head_dim': head_dim,
        'compute_dtype': compute_dtype,
        'mask_neg': -1e20 * scale,   # matches masked_fill(-1e20) / sqrt(E)
    }


# ---------------------------------------------------------------------------
# Per-block pallas_call wrapper + full encoder forward
# ---------------------------------------------------------------------------
def encoder_block_pallas(x, key_mask, lp, packed, *, approx_recip):
    n, seq, emb = x.shape
    heads, head_dim = packed['heads'], packed['head_dim']
    cdt = packed['compute_dtype']
    ffn = lp['w1_t'].shape[1]
    ffn_tile = min(ffn, 2048)

    act_bytes = jnp.dtype(x.dtype).itemsize
    cdt_bytes = jnp.dtype(cdt).itemsize
    cap = _vmem_capacity_bytes()
    est_fn = functools.partial(_vmem_bytes_estimate, seq=seq, emb=emb, ffn=ffn,
                               ffn_tile=ffn_tile, act_bytes=act_bytes,
                               cdt_bytes=cdt_bytes)
    bt = _choose_batch_tile(n, seq, est_fn, int(cap * 0.6))
    # Derive the limit from the actual buffers; never request the full chip.
    vmem_limit = int(min(cap * 3 // 4, max(2 * est_fn(bt), 16 * 1024 * 1024)))

    kernel = functools.partial(_encoder_block_kernel, bt, seq, emb, heads,
                               head_dim, ffn, ffn_tile, packed['mask_neg'],
                               cdt, approx_recip)

    def const_spec(shape):
        zeros = (0,) * len(shape)
        try:    # single-buffer resident constants (index map never changes)
            return pl.BlockSpec(shape, lambda b: zeros,
                                pipeline_mode=pl.Buffered(1))
        except TypeError:
            return pl.BlockSpec(shape, lambda b: zeros)

    return pl.pallas_call(
        kernel,
        out_shape=jax.ShapeDtypeStruct((n, seq, emb), x.dtype),
        grid_spec=pltpu.PrefetchScalarGridSpec(
            num_scalar_prefetch=0,
            grid=(n // bt,),
            in_specs=[
                pl.BlockSpec((bt, seq, emb), lambda b: (b, 0, 0)),   # x
                pl.BlockSpec((bt, 1, seq), lambda b: (b, 0, 0)),     # key mask
                const_spec((emb, emb)),   # Wq block-diag (scale folded in)
                const_spec((emb, emb)),   # Wk block-diag
                const_spec((emb, emb)),   # Wv block-diag
                const_spec((emb, emb)),   # fc_out.weight.T
                const_spec((1, emb)),     # fc_out bias
                const_spec((1, emb)),     # ln1 gamma
                const_spec((1, emb)),     # ln1 beta
                const_spec((emb, ffn)),   # ff W1.T
                const_spec((1, ffn)),     # ff b1
                const_spec((ffn, emb)),   # ff W2.T
                const_spec((1, emb)),     # ff b2
                const_spec((1, emb)),     # ln2 gamma
                const_spec((1, emb)),     # ln2 beta
            ],
            out_specs=pl.BlockSpec((bt, seq, emb), lambda b: (b, 0, 0)),
        ),
        compiler_params=pltpu.CompilerParams(
            dimension_semantics=("parallel",),
            vmem_limit_bytes=vmem_limit),
    )(x, key_mask, lp['wq_bd'], lp['wk_bd'], lp['wv_bd'], lp['wo_t'], lp['bo'],
      lp['g1'], lp['be1'], lp['w1_t'], lp['b1'], lp['w2_t'], lp['b2'],
      lp['g2'], lp['be2'])


def encoder_forward_pallas(token_ids, mask, packed, *, approx_recip=True):
    n, seq = token_ids.shape
    positions = jnp.arange(seq, dtype=jnp.int32)
    # TODO(synk): embedding-table gather and (training-mode) dropout RNG stay
    #             as plain JAX ops; dropout here is eval-mode identity.
    x = (jnp.take(packed['word_embedding'], token_ids, axis=0)
         + jnp.take(packed['position_embedding'], positions, axis=0)[None])
    # Inter-layer activations carried in the compute dtype (bf16 fast path).
    x = x.astype(packed['compute_dtype'])

    # Compact (N, 1, L) key-padding mask; the dense (L, L) bias is rebuilt
    # in-kernel.  TODO(synk): general (Lq, Lk) masks would need a dense path.
    m = jnp.asarray(mask)
    if m.ndim == 4:
        assert m.shape[1] == 1 and m.shape[2] == 1, 'expect (N,1,1,L) src mask'
        m = m[:, 0, 0, :]
    key_mask = jnp.broadcast_to(m, (n, seq)).astype(jnp.int32).reshape(n, 1, seq)

    for lp in packed['layers']:
        x = encoder_block_pallas(x, key_mask, lp, packed,
                                 approx_recip=approx_recip)
    return x


# ---------------------------------------------------------------------------
# Pure-JAX reference mirroring the PyTorch forward exactly (eval mode)
# ---------------------------------------------------------------------------
def _self_attention_ref(values, keys, query, mask, lp, heads):
    n, lq, emb = query.shape
    d = emb // heads
    v = values.reshape(n, -1, heads, d)
    k = keys.reshape(n, -1, heads, d)
    q = query.reshape(n, lq, heads, d)
    v_ln = jnp.einsum('nlhd,od->nlho', v, lp['wv'])
    k_ln = jnp.einsum('nlhd,od->nlho', k, lp['wk'])
    q_ln = jnp.einsum('nqhd,od->nqho', q, lp['wq'])
    energy = jnp.einsum('nqhd,nkhd->nhqk', q_ln, k_ln)
    energy = jnp.where(mask == 0, -1e20, energy)
    attn = jax.nn.softmax(energy / math.sqrt(emb), axis=3)
    out = jnp.einsum('nhql,nlhd->nqhd', attn, v_ln).reshape(n, lq, emb)
    return out @ lp['wo'].T + lp['bo']


def _layer_norm_ref(x, g, b, eps=1e-5):
    mu = x.mean(-1, keepdims=True)
    var = ((x - mu) ** 2).mean(-1, keepdims=True)
    return (x - mu) / jnp.sqrt(var + eps) * g + b


def _encoder_block_ref(x, mask, lp, heads):
    a = _self_attention_ref(x, x, x, mask, lp, heads)
    h1 = _layer_norm_ref(a + x, lp['ln1_g'], lp['ln1_b'])
    f = jnp.maximum(h1 @ lp['w1'].T + lp['b1'], 0.0) @ lp['w2'].T + lp['b2']
    return _layer_norm_ref(f + h1, lp['ln2_g'], lp['ln2_b'])


def encoder_forward_ref(token_ids, mask, params, heads):
    n, seq = token_ids.shape
    positions = jnp.arange(seq)
    x = (params['word_embedding'][token_ids]
         + params['position_embedding'][positions][None])
    with jax.default_matmul_precision('float32'):
        for lp in params['layers']:
            x = _encoder_block_ref(x, mask, lp, heads)
    return x


if __name__ == "__main__":
    # Small deterministic config consistent with the module.
    src_vocab_size, max_length = 50, 16
    batch, seq, heads = 2, 8, 2
    embed, forward_expansion, num_layers = 32, 4, 2
    head_dim = embed // heads
    ffn = forward_expansion * embed

    root = jax.random.PRNGKey(0)
    k_emb, k_pos, k_tok, k_layers = jax.random.split(root, 4)

    params = {
        'word_embedding': jax.random.normal(k_emb, (src_vocab_size, embed),
                                            jnp.float32),
        'position_embedding': jax.random.normal(k_pos, (max_length, embed),
                                                jnp.float32),
        'layers': [],
    }

    def linear_init(key, out_f, in_f, bias=True):
        kw, kb = jax.random.split(key)
        bound = 1.0 / math.sqrt(in_f)
        w = jax.random.uniform(kw, (out_f, in_f), jnp.float32, -bound, bound)
        if not bias:
            return w
        b = jax.random.uniform(kb, (out_f,), jnp.float32, -bound, bound)
        return w, b

    for lk in jax.random.split(k_layers, num_layers):
        kq, kk, kv, ko, k1, k2 = jax.random.split(lk, 6)
        wo, bo = linear_init(ko, embed, embed)
        w1, b1 = linear_init(k1, ffn, embed)
        w2, b2 = linear_init(k2, embed, ffn)
        params['layers'].append({
            'wq': linear_init(kq, head_dim, head_dim, bias=False),
            'wk': linear_init(kk, head_dim, head_dim, bias=False),
            'wv': linear_init(kv, head_dim, head_dim, bias=False),
            'wo': wo, 'bo': bo,
            'ln1_g': jnp.ones((embed,), jnp.float32),
            'ln1_b': jnp.zeros((embed,), jnp.float32),
            'w1': w1, 'b1': b1, 'w2': w2, 'b2': b2,
            'ln2_g': jnp.ones((embed,), jnp.float32),
            'ln2_b': jnp.zeros((embed,), jnp.float32),
        })

    token_ids = jax.random.randint(k_tok, (batch, seq), 0, src_vocab_size,
                                   dtype=jnp.int32)
    # Padding-style source mask: batch 0 attends to all 8 keys, batch 1 to 6.
    valid_len = jnp.array([8, 6], dtype=jnp.int32)
    src_mask = (jnp.arange(seq, dtype=jnp.int32)[None, :]
                < valid_len[:, None]).astype(jnp.int32)
    mask = src_mask[:, None, None, :]          # (N, 1, 1, L)

    ref = encoder_forward_ref(token_ids, mask, params, heads)

    # Fast path: bf16 MXU operands, bf16 inter-layer activations, approximate
    # softmax reciprocal.  Weights packed once (block-diag QKV, scale folded).
    packed_bf16 = pack_encoder_params(params, heads=heads,
                                      compute_dtype=jnp.bfloat16)
    out = encoder_forward_pallas(token_ids, mask, packed_bf16,
                                 approx_recip=True)
    out = jax.block_until_ready(out).astype(jnp.float32)
    assert out.shape == (batch, seq, embed)
    max_err = float(jnp.max(jnp.abs(out - ref)))
    mean_err = float(jnp.mean(jnp.abs(out - ref)))
    # Tolerance reflects bf16 matmuls + bf16 inter-layer activations + approx
    # reciprocal vs the f32 reference.
    assert max_err < 2.5e-1 and mean_err < 4e-2, (max_err, mean_err)

    # Exact-arithmetic path (f32 matmuls/activations, exact recip): tight check.
    packed_f32 = pack_encoder_params(params, heads=heads,
                                     compute_dtype=jnp.float32)
    out_f32 = encoder_forward_pallas(token_ids, mask, packed_f32,
                                     approx_recip=False)
    out_f32 = jax.block_until_ready(out_f32)
    assert jnp.allclose(out_f32, ref, atol=2e-3, rtol=2e-3), \
        float(jnp.max(jnp.abs(out_f32 - ref)))

    print("KERNEL_OK")
</pallas_src>

<mosaic_0001>
module attributes {stable_mosaic.version = 11 : i64} {
  func.func @_encoder_block_kernel(%arg0: i32, %arg1: memref<1x8x32xbf16, #tpu.memory_space<vmem>>, %arg2: memref<1x1x8xi32, #tpu.memory_space<vmem>>, %arg3: memref<32x32xbf16, #tpu.memory_space<vmem>>, %arg4: memref<32x32xbf16, #tpu.memory_space<vmem>>, %arg5: memref<32x32xbf16, #tpu.memory_space<vmem>>, %arg6: memref<32x32xbf16, #tpu.memory_space<vmem>>, %arg7: memref<1x32xf32, #tpu.memory_space<vmem>>, %arg8: memref<1x32xf32, #tpu.memory_space<vmem>>, %arg9: memref<1x32xf32, #tpu.memory_space<vmem>>, %arg10: memref<32x128xbf16, #tpu.memory_space<vmem>>, %arg11: memref<1x128xf32, #tpu.memory_space<vmem>>, %arg12: memref<128x32xbf16, #tpu.memory_space<vmem>>, %arg13: memref<1x32xf32, #tpu.memory_space<vmem>>, %arg14: memref<1x32xf32, #tpu.memory_space<vmem>>, %arg15: memref<1x32xf32, #tpu.memory_space<vmem>>, %arg16: memref<1x8x32xbf16, #tpu.memory_space<vmem>>) attributes {dimension_semantics = [#tpu.dimension_semantics<parallel>], iteration_bounds = array<i64: 2>, scalar_prefetch = 0 : i64, scratch_operands = 0 : i64, tpu.core_type = #tpu.core_type<tc>, window_params = [{transform_indices = @transform_0, window_bounds = array<i64: 1, 8, 32>}, {transform_indices = @transform_1, window_bounds = array<i64: 1, 1, 8>}, {pipeline_mode = #tpu.pipeline_mode<synchronous>, transform_indices = @transform_2, window_bounds = array<i64: 32, 32>}, {pipeline_mode = #tpu.pipeline_mode<synchronous>, transform_indices = @transform_3, window_bounds = array<i64: 32, 32>}, {pipeline_mode = #tpu.pipeline_mode<synchronous>, transform_indices = @transform_4, window_bounds = array<i64: 32, 32>}, {pipeline_mode = #tpu.pipeline_mode<synchronous>, transform_indices = @transform_5, window_bounds = array<i64: 32, 32>}, {pipeline_mode = #tpu.pipeline_mode<synchronous>, transform_indices = @transform_6, window_bounds = array<i64: 1, 32>}, {pipeline_mode = #tpu.pipeline_mode<synchronous>, transform_indices = @transform_7, window_bounds = array<i64: 1, 32>}, {pipeline_mode = #tpu.pipeline_mode<synchronous>, transform_indices = @transform_8, window_bounds = array<i64: 1, 32>}, {pipeline_mode = #tpu.pipeline_mode<synchronous>, transform_indices = @transform_9, window_bounds = array<i64: 32, 128>}, {pipeline_mode = #tpu.pipeline_mode<synchronous>, transform_indices = @transform_10, window_bounds = array<i64: 1, 128>}, {pipeline_mode = #tpu.pipeline_mode<synchronous>, transform_indices = @transform_11, window_bounds = array<i64: 128, 32>}, {pipeline_mode = #tpu.pipeline_mode<synchronous>, transform_indices = @transform_12, window_bounds = array<i64: 1, 32>}, {pipeline_mode = #tpu.pipeline_mode<synchronous>, transform_indices = @transform_13, window_bounds = array<i64: 1, 32>}, {pipeline_mode = #tpu.pipeline_mode<synchronous>, transform_indices = @transform_14, window_bounds = array<i64: 1, 32>}, {transform_indices = @transform_15, window_bounds = array<i64: 1, 8, 32>}]} {
    %c0 = arith.constant 0 : index
    %c0_0 = arith.constant 0 : index
    %c0_1 = arith.constant 0 : index
    %0 = vector.load %arg1[%c0, %c0_0, %c0_1] : memref<1x8x32xbf16, #tpu.memory_space<vmem>>, vector<1x8x32xbf16>
    %1 = vector.shape_cast %0 : vector<1x8x32xbf16> to vector<8x32xbf16>
    %2 = arith.extf %1 : vector<8x32xbf16> to vector<8x32xf32>
    %c0_2 = arith.constant 0 : index
    %c0_3 = arith.constant 0 : index
    %3 = vector.load %arg3[%c0_2, %c0_3] : memref<32x32xbf16, #tpu.memory_space<vmem>>, vector<32x32xbf16>
    %cst = arith.constant dense<0.000000e+00> : vector<8x32xf32>
    %4 = tpu.matmul %1, %3, %cst {dimension_numbers = #tpu.dot_dimension_numbers<[1], [0], [0], [1], [0, 0, 1, 1], [], []>} : vector<8x32xbf16>, vector<32x32xbf16>, vector<8x32xf32> -> vector<8x32xf32>
    %5 = arith.truncf %4 : vector<8x32xf32> to vector<8x32xbf16>
    %6 = vector.shape_cast %5 : vector<8x32xbf16> to vector<1x8x32xbf16>
    %c0_4 = arith.constant 0 : index
    %c0_5 = arith.constant 0 : index
    %7 = vector.load %arg4[%c0_4, %c0_5] : memref<32x32xbf16, #tpu.memory_space<vmem>>, vector<32x32xbf16>
    %cst_6 = arith.constant dense<0.000000e+00> : vector<8x32xf32>
    %8 = tpu.matmul %1, %7, %cst_6 {dimension_numbers = #tpu.dot_dimension_numbers<[1], [0], [0], [1], [0, 0, 1, 1], [], []>} : vector<8x32xbf16>, vector<32x32xbf16>, vector<8x32xf32> -> vector<8x32xf32>
    %9 = arith.truncf %8 : vector<8x32xf32> to vector<8x32xbf16>
    %10 = vector.shape_cast %9 : vector<8x32xbf16> to vector<1x8x32xbf16>
    %c0_7 = arith.constant 0 : index
    %c0_8 = arith.constant 0 : index
    %11 = vector.load %arg5[%c0_7, %c0_8] : memref<32x32xbf16, #tpu.memory_space<vmem>>, vector<32x32xbf16>
    %cst_9 = arith.constant dense<0.000000e+00> : vector<8x32xf32>
    %12 = tpu.matmul %1, %11, %cst_9 {dimension_numbers = #tpu.dot_dimension_numbers<[1], [0], [0], [1], [0, 0, 1, 1], [], []>} : vector<8x32xbf16>, vector<32x32xbf16>, vector<8x32xf32> -> vector<8x32xf32>
    %13 = arith.truncf %12 : vector<8x32xf32> to vector<8x32xbf16>
    %14 = vector.shape_cast %13 : vector<8x32xbf16> to vector<1x8x32xbf16>
    %c0_10 = arith.constant 0 : index
    %c0_11 = arith.constant 0 : index
    %c0_12 = arith.constant 0 : index
    %15 = vector.load %arg2[%c0_10, %c0_11, %c0_12] : memref<1x1x8xi32, #tpu.memory_space<vmem>>, vector<1x1x8xi32>
    %c0_i32 = arith.constant 0 : i32
    %16 = vector.broadcast %c0_i32 : i32 to vector<1x1x8xi32>
    %17 = arith.cmpi eq, %15, %16 : vector<1x1x8xi32>
    %cst_13 = arith.constant -1.76776698E+19 : f32
    %cst_14 = arith.constant 0.000000e+00 : f32
    %18 = vector.broadcast %cst_13 : f32 to vector<1x1x8xf32>
    %19 = vector.broadcast %cst_14 : f32 to vector<1x1x8xf32>
    %20 = arith.select %17, %18, %19 : vector<1x1x8xi1>, vector<1x1x8xf32>
    %21 = vector.extract_strided_slice %6 {offsets = [0, 0, 0], sizes = [1, 8, 16], strides = [1, 1, 1]} : vector<1x8x32xbf16> to vector<1x8x16xbf16>
    %22 = vector.extract_strided_slice %10 {offsets = [0, 0, 0], sizes = [1, 8, 16], strides = [1, 1, 1]} : vector<1x8x32xbf16> to vector<1x8x16xbf16>
    %23 = vector.extract_strided_slice %14 {offsets = [0, 0, 0], sizes = [1, 8, 16], strides = [1, 1, 1]} : vector<1x8x32xbf16> to vector<1x8x16xbf16>
    "tpu.trace_start"() <{level = 10 : i32, message = "bqd,bkd->bqk"}> : () -> ()
    %cst_15 = arith.constant dense<0.000000e+00> : vector<1x8x8xf32>
    %24 = tpu.matmul %21, %22, %cst_15 {dimension_numbers = #tpu.dot_dimension_numbers<[2], [2], [1], [1], [0, 0, 0, 1, 1, 1], [0], [0]>} : vector<1x8x16xbf16>, vector<1x8x16xbf16>, vector<1x8x8xf32> -> vector<1x8x8xf32>
    "tpu.trace_stop"() : () -> ()
    %25 = vector.broadcast %20 : vector<1x1x8xf32> to vector<1x8x8xf32>
    %26 = arith.addf %24, %25 : vector<1x8x8xf32>
    %cst_16 = arith.constant dense<0xFF800000> : vector<1x8xf32>
    %27 = vector.multi_reduction <maximumf>, %26, %cst_16 [2] : vector<1x8x8xf32> to vector<1x8xf32>
    %28 = vector.shape_cast %27 : vector<1x8xf32> to vector<1x8x1xf32>
    %29 = vector.broadcast %28 : vector<1x8x1xf32> to vector<1x8x8xf32>
    %30 = arith.subf %26, %29 : vector<1x8x8xf32>
    %31 = math.exp %30 : vector<1x8x8xf32>
    %cst_17 = arith.constant dense<0.000000e+00> : vector<1x8xf32>
    %32 = vector.multi_reduction <add>, %31, %cst_17 [2] : vector<1x8x8xf32> to vector<1x8xf32>
    %33 = vector.shape_cast %32 : vector<1x8xf32> to vector<1x8x1xf32>
    %34 = tpu.reciprocal %33 {approx = true} : vector<1x8x1xf32> -> vector<1x8x1xf32>
    %35 = vector.broadcast %34 : vector<1x8x1xf32> to vector<1x8x8xf32>
    %36 = arith.mulf %31, %35 : vector<1x8x8xf32>
    %37 = arith.truncf %36 : vector<1x8x8xf32> to vector<1x8x8xbf16>
    "tpu.trace_start"() <{level = 10 : i32, message = "bqk,bkd->bqd"}> : () -> ()
    %cst_18 = arith.constant dense<0.000000e+00> : vector<1x8x16xf32>
    %38 = tpu.matmul %37, %23, %cst_18 {dimension_numbers = #tpu.dot_dimension_numbers<[2], [1], [1], [2], [0, 0, 0, 1, 1, 2], [0], [0]>} : vector<1x8x8xbf16>, vector<1x8x16xbf16>, vector<1x8x16xf32> -> vector<1x8x16xf32>
    "tpu.trace_stop"() : () -> ()
    %39 = arith.truncf %38 : vector<1x8x16xf32> to vector<1x8x16xbf16>
    %40 = vector.extract_strided_slice %6 {offsets = [0, 0, 16], sizes = [1, 8, 16], strides = [1, 1, 1]} : vector<1x8x32xbf16> to vector<1x8x16xbf16>
    %41 = vector.extract_strided_slice %10 {offsets = [0, 0, 16], sizes = [1, 8, 16], strides = [1, 1, 1]} : vector<1x8x32xbf16> to vector<1x8x16xbf16>
    %42 = vector.extract_strided_slice %14 {offsets = [0, 0, 16], sizes = [1, 8, 16], strides = [1, 1, 1]} : vector<1x8x32xbf16> to vector<1x8x16xbf16>
    "tpu.trace_start"() <{level = 10 : i32, message = "bqd,bkd->bqk"}> : () -> ()
    %cst_19 = arith.constant dense<0.000000e+00> : vector<1x8x8xf32>
    %43 = tpu.matmul %40, %41, %cst_19 {dimension_numbers = #tpu.dot_dimension_numbers<[2], [2], [1], [1], [0, 0, 0, 1, 1, 1], [0], [0]>} : vector<1x8x16xbf16>, vector<1x8x16xbf16>, vector<1x8x8xf32> -> vector<1x8x8xf32>
    "tpu.trace_stop"() : () -> ()
    %44 = vector.broadcast %20 : vector<1x1x8xf32> to vector<1x8x8xf32>
    %45 = arith.addf %43, %44 : vector<1x8x8xf32>
    %cst_20 = arith.constant dense<0xFF800000> : vector<1x8xf32>
    %46 = vector.multi_reduction <maximumf>, %45, %cst_20 [2] : vector<1x8x8xf32> to vector<1x8xf32>
    %47 = vector.shape_cast %46 : vector<1x8xf32> to vector<1x8x1xf32>
    %48 = vector.broadcast %47 : vector<1x8x1xf32> to vector<1x8x8xf32>
    %49 = arith.subf %45, %48 : vector<1x8x8xf32>
    %50 = math.exp %49 : vector<1x8x8xf32>
    %cst_21 = arith.constant dense<0.000000e+00> : vector<1x8xf32>
    %51 = vector.multi_reduction <add>, %50, %cst_21 [2] : vector<1x8x8xf32> to vector<1x8xf32>
    %52 = vector.shape_cast %51 : vector<1x8xf32> to vector<1x8x1xf32>
    %53 = tpu.reciprocal %52 {approx = true} : vector<1x8x1xf32> -> vector<1x8x1xf32>
    %54 = vector.broadcast %53 : vector<1x8x1xf32> to vector<1x8x8xf32>
    %55 = arith.mulf %50, %54 : vector<1x8x8xf32>
    %56 = arith.truncf %55 : vector<1x8x8xf32> to vector<1x8x8xbf16>
    "tpu.trace_start"() <{level = 10 : i32, message = "bqk,bkd->bqd"}> : () -> ()
    %cst_22 = arith.constant dense<0.000000e+00> : vector<1x8x16xf32>
    %57 = tpu.matmul %56, %42, %cst_22 {dimension_numbers = #tpu.dot_dimension_numbers<[2], [1], [1], [2], [0, 0, 0, 1, 1, 2], [0], [0]>} : vector<1x8x8xbf16>, vector<1x8x16xbf16>, vector<1x8x16xf32> -> vector<1x8x16xf32>
    "tpu.trace_stop"() : () -> ()
    %58 = arith.truncf %57 : vector<1x8x16xf32> to vector<1x8x16xbf16>
    %59 = tpu.concatenate %39, %58 in 2 : vector<1x8x16xbf16>, vector<1x8x16xbf16> -> vector<1x8x32xbf16>
    %60 = vector.shape_cast %59 : vector<1x8x32xbf16> to vector<8x32xbf16>
    %c0_23 = arith.constant 0 : index
    %c0_24 = arith.constant 0 : index
    %61 = vector.load %arg6[%c0_23, %c0_24] : memref<32x32xbf16, #tpu.memory_space<vmem>>, vector<32x32xbf16>
    %cst_25 = arith.constant dense<0.000000e+00> : vector<8x32xf32>
    %62 = tpu.matmul %60, %61, %cst_25 {dimension_numbers = #tpu.dot_dimension_numbers<[1], [0], [0], [1], [0, 0, 1, 1], [], []>} : vector<8x32xbf16>, vector<32x32xbf16>, vector<8x32xf32> -> vector<8x32xf32>
    %c0_26 = arith.constant 0 : index
    %c0_27 = arith.constant 0 : index
    %63 = vector.load %arg7[%c0_26, %c0_27] : memref<1x32xf32, #tpu.memory_space<vmem>>, vector<1x32xf32>
    %64 = vector.broadcast %63 : vector<1x32xf32> to vector<8x32xf32>
    %65 = arith.addf %62, %64 : vector<8x32xf32>
    %66 = arith.addf %65, %2 : vector<8x32xf32>
    %c0_28 = arith.constant 0 : index
    %c0_29 = arith.constant 0 : index
    %67 = vector.load %arg8[%c0_28, %c0_29] : memref<1x32xf32, #tpu.memory_space<vmem>>, vector<1x32xf32>
    %c0_30 = arith.constant 0 : index
    %c0_31 = arith.constant 0 : index
    %68 = vector.load %arg9[%c0_30, %c0_31] : memref<1x32xf32, #tpu.memory_space<vmem>>, vector<1x32xf32>
    %cst_32 = arith.constant dense<0.000000e+00> : vector<8xf32>
    %69 = vector.multi_reduction <add>, %66, %cst_32 [1] : vector<8x32xf32> to vector<8xf32>
    %70 = vector.shape_cast %69 : vector<8xf32> to vector<8x1xf32>
    %cst_33 = arith.constant 3.200000e+01 : f32
    %71 = vector.broadcast %cst_33 : f32 to vector<8x1xf32>
    %72 = arith.divf %70, %71 : vector<8x1xf32>
    %73 = vector.broadcast %72 : vector<8x1xf32> to vector<8x32xf32>
    %74 = arith.subf %66, %73 : vector<8x32xf32>
    %75 = arith.mulf %74, %74 : vector<8x32xf32>
    %cst_34 = arith.constant dense<0.000000e+00> : vector<8xf32>
    %76 = vector.multi_reduction <add>, %75, %cst_34 [1] : vector<8x32xf32> to vector<8xf32>
    %77 = vector.shape_cast %76 : vector<8xf32> to vector<8x1xf32>
    %cst_35 = arith.constant 3.200000e+01 : f32
    %78 = vector.broadcast %cst_35 : f32 to vector<8x1xf32>
    %79 = arith.divf %77, %78 : vector<8x1xf32>
    %cst_36 = arith.constant 9.99999974E-6 : f32
    %80 = vector.broadcast %cst_36 : f32 to vector<8x1xf32>
    %81 = arith.addf %79, %80 : vector<8x1xf32>
    %82 = math.rsqrt %81 : vector<8x1xf32>
    %83 = vector.broadcast %82 : vector<8x1xf32> to vector<8x32xf32>
    %84 = arith.mulf %74, %83 : vector<8x32xf32>
    %85 = vector.broadcast %67 : vector<1x32xf32> to vector<8x32xf32>
    %86 = arith.mulf %84, %85 : vector<8x32xf32>
    %87 = vector.broadcast %68 : vector<1x32xf32> to vector<8x32xf32>
    %88 = arith.addf %86, %87 : vector<8x32xf32>
    %89 = arith.truncf %88 : vector<8x32xf32> to vector<8x32xbf16>
    %cst_37 = arith.constant 0.000000e+00 : f32
    %90 = vector.broadcast %cst_37 : f32 to vector<8x32xf32>
    %c0_38 = arith.constant 0 : index
    %c0_39 = arith.constant 0 : index
    %91 = vector.load %arg10[%c0_38, %c0_39] : memref<32x128xbf16, #tpu.memory_space<vmem>>, vector<32x128xbf16>
    %cst_40 = arith.constant dense<0.000000e+00> : vector<8x128xf32>
    %92 = tpu.matmul %89, %91, %cst_40 {dimension_numbers = #tpu.dot_dimension_numbers<[1], [0], [0], [1], [0, 0, 1, 1], [], []>} : vector<8x32xbf16>, vector<32x128xbf16>, vector<8x128xf32> -> vector<8x128xf32>
    %c0_41 = arith.constant 0 : index
    %c0_42 = arith.constant 0 : index
    %93 = vector.load %arg11[%c0_41, %c0_42] : memref<1x128xf32, #tpu.memory_space<vmem>>, vector<1x128xf32>
    %94 = vector.broadcast %93 : vector<1x128xf32> to vector<8x128xf32>
    %95 = arith.addf %92, %94 : vector<8x128xf32>
    %cst_43 = arith.constant 0.000000e+00 : f32
    %96 = vector.broadcast %cst_43 : f32 to vector<8x128xf32>
    %97 = arith.maximumf %95, %96 : vector<8x128xf32>
    %98 = arith.truncf %97 : vector<8x128xf32> to vector<8x128xbf16>
    %c0_44 = arith.constant 0 : index
    %c0_45 = arith.constant 0 : index
    %99 = vector.load %arg12[%c0_44, %c0_45] : memref<128x32xbf16, #tpu.memory_space<vmem>>, vector<128x32xbf16>
    %cst_46 = arith.constant dense<0.000000e+00> : vector<8x32xf32>
    %100 = tpu.matmul %98, %99, %cst_46 {dimension_numbers = #tpu.dot_dimension_numbers<[1], [0], [0], [1], [0, 0, 1, 1], [], []>} : vector<8x128xbf16>, vector<128x32xbf16>, vector<8x32xf32> -> vector<8x32xf32>
    %101 = arith.addf %90, %100 : vector<8x32xf32>
    %c0_47 = arith.constant 0 : index
    %c0_48 = arith.constant 0 : index
    %102 = vector.load %arg13[%c0_47, %c0_48] : memref<1x32xf32, #tpu.memory_space<vmem>>, vector<1x32xf32>
    %103 = vector.broadcast %102 : vector<1x32xf32> to vector<8x32xf32>
    %104 = arith.addf %101, %103 : vector<8x32xf32>
    %105 = arith.addf %104, %88 : vector<8x32xf32>
    %c0_49 = arith.constant 0 : index
    %c0_50 = arith.constant 0 : index
    %106 = vector.load %arg14[%c0_49, %c0_50] : memref<1x32xf32, #tpu.memory_space<vmem>>, vector<1x32xf32>
    %c0_51 = arith.constant 0 : index
    %c0_52 = arith.constant 0 : index
    %107 = vector.load %arg15[%c0_51, %c0_52] : memref<1x32xf32, #tpu.memory_space<vmem>>, vector<1x32xf32>
    %cst_53 = arith.constant dense<0.000000e+00> : vector<8xf32>
    %108 = vector.multi_reduction <add>, %105, %cst_53 [1] : vector<8x32xf32> to vector<8xf32>
    %109 = vector.shape_cast %108 : vector<8xf32> to vector<8x1xf32>
    %cst_54 = arith.constant 3.200000e+01 : f32
    %110 = vector.broadcast %cst_54 : f32 to vector<8x1xf32>
    %111 = arith.divf %109, %110 : vector<8x1xf32>
    %112 = vector.broadcast %111 : vector<8x1xf32> to vector<8x32xf32>
    %113 = arith.subf %105, %112 : vector<8x32xf32>
    %114 = arith.mulf %113, %113 : vector<8x32xf32>
    %cst_55 = arith.constant dense<0.000000e+00> : vector<8xf32>
    %115 = vector.multi_reduction <add>, %114, %cst_55 [1] : vector<8x32xf32> to vector<8xf32>
    %116 = vector.shape_cast %115 : vector<8xf32> to vector<8x1xf32>
    %cst_56 = arith.constant 3.200000e+01 : f32
    %117 = vector.broadcast %cst_56 : f32 to vector<8x1xf32>
    %118 = arith.divf %116, %117 : vector<8x1xf32>
    %cst_57 = arith.constant 9.99999974E-6 : f32
    %119 = vector.broadcast %cst_57 : f32 to vector<8x1xf32>
    %120 = arith.addf %118, %119 : vector<8x1xf32>
    %121 = math.rsqrt %120 : vector<8x1xf32>
    %122 = vector.broadcast %121 : vector<8x1xf32> to vector<8x32xf32>
    %123 = arith.mulf %113, %122 : vector<8x32xf32>
    %124 = vector.broadcast %106 : vector<1x32xf32> to vector<8x32xf32>
    %125 = arith.mulf %123, %124 : vector<8x32xf32>
    %126 = vector.broadcast %107 : vector<1x32xf32> to vector<8x32xf32>
    %127 = arith.addf %125, %126 : vector<8x32xf32>
    %128 = vector.shape_cast %127 : vector<8x32xf32> to vector<1x8x32xf32>
    %129 = arith.truncf %128 : vector<1x8x32xf32> to vector<1x8x32xbf16>
    %c0_58 = arith.constant 0 : index
    %c0_59 = arith.constant 0 : index
    %c0_60 = arith.constant 0 : index
    %130 = vector.load %arg16[%c0_58, %c0_59, %c0_60] : memref<1x8x32xbf16, #tpu.memory_space<vmem>>, vector<1x8x32xbf16>
    tpu.vector_store %arg16[%c0_58, %c0_59, %c0_60], %129 {strides = array<i32>} : memref<1x8x32xbf16, #tpu.memory_space<vmem>>, vector<1x8x32xbf16>,
    return
  }
  func.func @transform_0(%arg0: i32) -> (i32, i32, i32) {
    %c0_i32 = arith.constant 0 : i32
    %c0_i32_0 = arith.constant 0 : i32
    %c0_i32_1 = arith.constant 0 : i32
    return %arg0, %c0_i32, %c0_i32_0 : i32, i32, i32
  }
  func.func @transform_1(%arg0: i32) -> (i32, i32, i32) {
    %c0_i32 = arith.constant 0 : i32
    %c0_i32_0 = arith.constant 0 : i32
    %c0_i32_1 = arith.constant 0 : i32
    return %arg0, %c0_i32, %c0_i32_0 : i32, i32, i32
  }
  func.func @transform_2(%arg0: i32) -> (i32, i32) {
    %c0_i32 = arith.constant 0 : i32
    %c0_i32_0 = arith.constant 0 : i32
    %c0_i32_1 = arith.constant 0 : i32
    return %c0_i32, %c0_i32_0 : i32, i32
  }
  func.func @transform_3(%arg0: i32) -> (i32, i32) {
    %c0_i32 = arith.constant 0 : i32
    %c0_i32_0 = arith.constant 0 : i32
    %c0_i32_1 = arith.constant 0 : i32
    return %c0_i32, %c0_i32_0 : i32, i32
  }
  func.func @transform_4(%arg0: i32) -> (i32, i32) {
    %c0_i32 = arith.constant 0 : i32
    %c0_i32_0 = arith.constant 0 : i32
    %c0_i32_1 = arith.constant 0 : i32
    return %c0_i32, %c0_i32_0 : i32, i32
  }
  func.func @transform_5(%arg0: i32) -> (i32, i32) {
    %c0_i32 = arith.constant 0 : i32
    %c0_i32_0 = arith.constant 0 : i32
    %c0_i32_1 = arith.constant 0 : i32
    return %c0_i32, %c0_i32_0 : i32, i32
  }
  func.func @transform_6(%arg0: i32) -> (i32, i32) {
    %c0_i32 = arith.constant 0 : i32
    %c0_i32_0 = arith.constant 0 : i32
    %c0_i32_1 = arith.constant 0 : i32
    return %c0_i32, %c0_i32_0 : i32, i32
  }
  func.func @transform_7(%arg0: i32) -> (i32, i32) {
    %c0_i32 = arith.constant 0 : i32
    %c0_i32_0 = arith.constant 0 : i32
    %c0_i32_1 = arith.constant 0 : i32
    return %c0_i32, %c0_i32_0 : i32, i32
  }
  func.func @transform_8(%arg0: i32) -> (i32, i32) {
    %c0_i32 = arith.constant 0 : i32
    %c0_i32_0 = arith.constant 0 : i32
    %c0_i32_1 = arith.constant 0 : i32
    return %c0_i32, %c0_i32_0 : i32, i32
  }
  func.func @transform_9(%arg0: i32) -> (i32, i32) {
    %c0_i32 = arith.constant 0 : i32
    %c0_i32_0 = arith.constant 0 : i32
    %c0_i32_1 = arith.constant 0 : i32
    return %c0_i32, %c0_i32_0 : i32, i32
  }
  func.func @transform_10(%arg0: i32) -> (i32, i32) {
    %c0_i32 = arith.constant 0 : i32
    %c0_i32_0 = arith.constant 0 : i32
    %c0_i32_1 = arith.constant 0 : i32
    return %c0_i32, %c0_i32_0 : i32, i32
  }
  func.func @transform_11(%arg0: i32) -> (i32, i32) {
    %c0_i32 = arith.constant 0 : i32
    %c0_i32_0 = arith.constant 0 : i32
    %c0_i32_1 = arith.constant 0 : i32
    return %c0_i32, %c0_i32_0 : i32, i32
  }
  func.func @transform_12(%arg0: i32) -> (i32, i32) {
    %c0_i32 = arith.constant 0 : i32
    %c0_i32_0 = arith.constant 0 : i32
    %c0_i32_1 = arith.constant 0 : i32
    return %c0_i32, %c0_i32_0 : i32, i32
  }
  func.func @transform_13(%arg0: i32) -> (i32, i32) {
    %c0_i32 = arith.constant 0 : i32
    %c0_i32_0 = arith.constant 0 : i32
    %c0_i32_1 = arith.constant 0 : i32
    return %c0_i32, %c0_i32_0 : i32, i32
  }
  func.func @transform_14(%arg0: i32) -> (i32, i32) {
    %c0_i32 = arith.constant 0 : i32
    %c0_i32_0 = arith.constant 0 : i32
    %c0_i32_1 = arith.constant 0 : i32
    return %c0_i32, %c0_i32_0 : i32, i32
  }
  func.func @transform_15(%arg0: i32) -> (i32, i32, i32) {
    %c0_i32 = arith.constant 0 : i32
    %c0_i32_0 = arith.constant 0 : i32
    %c0_i32_1 = arith.constant 0 : i32
    return %arg0, %c0_i32, %c0_i32_0 : i32, i32, i32
  }
}

</mosaic_0001>

<llo_original>
// kernel: tpu_custom_call.1
$region0: #{tpu_custom_call.1}
  #allocation0 [shape = 'u32[]', space=smem, size = 0x4, offset = 0x4, fixed_abs, tag = 'smem constant byte address 0x4 - core index']
  #allocation1 [shape = 'u32[72,128]{1,0:T(1,128)}', space=vmem, size = 0x9000, scoped, tag = 'internal scratch']
  %s0 = inlined_call_operand.hbm [shape: bf16[2,8,32], index: 0, kind: input, shape index: {}]
  %s1 = inlined_call_operand.hbm [shape: s32[2,1,8], index: 1, kind: input, shape index: {}]
  %s2 = inlined_call_operand.vmem [shape: bf16[32,32], index: 2, kind: input, shape index: {}]
  %s3 = inlined_call_operand.vmem [shape: bf16[32,32], index: 3, kind: input, shape index: {}]
  %s4 = inlined_call_operand.vmem [shape: bf16[32,32], index: 4, kind: input, shape index: {}]
  %s5 = inlined_call_operand.vmem [shape: bf16[32,32], index: 5, kind: input, shape index: {}]
  %s6 = inlined_call_operand.vmem [shape: f32[1,32], index: 6, kind: input, shape index: {}]
  %s7 = inlined_call_operand.vmem [shape: f32[1,32], index: 7, kind: input, shape index: {}]
  %s8 = inlined_call_operand.vmem [shape: f32[1,32], index: 8, kind: input, shape index: {}]
  %s9 = inlined_call_operand.vmem [shape: bf16[32,128], index: 9, kind: input, shape index: {}]
  %s10 = inlined_call_operand.vmem [shape: f32[1,128], index: 10, kind: input, shape index: {}]
  %s11 = inlined_call_operand.vmem [shape: bf16[128,32], index: 11, kind: input, shape index: {}]
  %s12 = inlined_call_operand.vmem [shape: f32[1,32], index: 12, kind: input, shape index: {}]
  %s13 = inlined_call_operand.vmem [shape: f32[1,32], index: 13, kind: input, shape index: {}]
  %s14 = inlined_call_operand.vmem [shape: f32[1,32], index: 14, kind: input, shape index: {}]
  %s15 = inlined_call_operand.hbm [shape: bf16[2,8,32], index: 15, kind: output, shape index: {}]
  %s16 = sld [smem:[#allocation0]]
  $region101: #{tpu_custom_call.1} parent=0
    _
  %s18 = ssub.s32 1, %s16
  %s19 = scalar_select 0, %s18, %s16
  $region1: #{tpu_custom_call.1} parent=0
    #allocation2 [shape = 'u8[4096]{0}', space=vmem, size = 0x1000, scoped, tag = 'input window, operand 0']
    #allocation3 [shape = 's32[2]{0}', space=sflag, size = 0x8, scoped, tag = 'scoped memory for tpu_custom_call.1']
    #allocation4 [shape = 's32[2]{0}', space=sflag, size = 0x8, scoped, tag = 'scoped memory for tpu_custom_call.1']
    #allocation5 [shape = 'u8[1024]{0}', space=vmem, size = 0x400, scoped, tag = 'input window, operand 1']
    #allocation6 [shape = 's32[2]{0}', space=sflag, size = 0x8, scoped, tag = 'scoped memory for tpu_custom_call.1']
    #allocation7 [shape = 'u8[4096]{0}', space=vmem, size = 0x1000, scoped, tag = 'output window, operand 0']
    %20 = vsyncpa [#allocation3], 0
    %s21 = scalar_lea.sflag [#allocation3], 1
    %22 = vsyncpa %s21, 0
    %23 = vsyncpa [#allocation6], 0
    %s24 = scalar_lea.sflag [#allocation6], 1
    %25 = vsyncpa %s24, 0
    %26 = vsyncpa [#allocation4], 0
    %s27 = scalar_lea.sflag [#allocation4], 1
    %28 = vsyncpa %s27, 0
    loop: start=0, step=1, limit=4
    $region2: #{tpu_custom_call.1} parent=1 // loop_pre_header
      _
    $region3: #{tpu_custom_call.1} parent=1 // loop_header
      %s30 = sphi 0, %s34
      %p31 = scmp.ge.s32.totalorder %s30, 4
      %s40 = sphi 0, %s42
      %s43 = sphi 0, %s40
      %s44 = sphi 0, %s43
      %s60 = sphi 0, %s44
      %s66 = sphi 0, %s68
      %s69 = sphi 0, %s66
      %s70 = sphi 0, %s69
      %s86 = sphi 0, %s70
      %s90 = sphi 0, %s90
      %s92 = sphi 0, %s90
      %s93 = sphi 0, %s92
      %s107 = sphi 0, %s93
      %s111 = sphi 0, %s111
      %s113 = sphi 0, %s111
      %s114 = sphi 0, %s113
      %s128 = sphi 0, %s114
      %s132 = sphi 0, %s132
      %s134 = sphi 0, %s132
      %s135 = sphi 0, %s134
      %s149 = sphi 0, %s135
      %s153 = sphi 0, %s153
      %s155 = sphi 0, %s153
      %s156 = sphi 0, %s155
      %s170 = sphi 0, %s156
      %s174 = sphi 0, %s174
      %s176 = sphi 0, %s174
      %s177 = sphi 0, %s176
      %s191 = sphi 0, %s177
      %s195 = sphi 0, %s195
      %s197 = sphi 0, %s195
      %s198 = sphi 0, %s197
      %s212 = sphi 0, %s198
      %s216 = sphi 0, %s216
      %s218 = sphi 0, %s216
      %s219 = sphi 0, %s218
      %s233 = sphi 0, %s219
      %s237 = sphi 0, %s237
      %s239 = sphi 0, %s237
      %s240 = sphi 0, %s239
      %s254 = sphi 0, %s240
      %s258 = sphi 0, %s258
      %s260 = sphi 0, %s258
      %s261 = sphi 0, %s260
      %s275 = sphi 0, %s261
      %s279 = sphi 0, %s279
      %s281 = sphi 0, %s279
      %s282 = sphi 0, %s281
      %s296 = sphi 0, %s282
      %s300 = sphi 0, %s300
      %s302 = sphi 0, %s300
      %s303 = sphi 0, %s302
      %s317 = sphi 0, %s303
      %s321 = sphi 0, %s321
      %s323 = sphi 0, %s321
      %s324 = sphi 0, %s323
      %s338 = sphi 0, %s324
      %s342 = sphi 0, %s342
      %s344 = sphi 0, %s342
      %s345 = sphi 0, %s344
      %s359 = sphi 0, %s345
      %s365 = sphi 0, %s367
      %s368 = sphi 0, %s365
      %s369 = sphi 0, %s368
      %s385 = sphi 0, %s369
    $region4: #{tpu_custom_call.1} parent=1 // loop_header_branch
      %33 = sbr.rel (%p31) target = $region8
    $region5: #{tpu_custom_call.1} parent=1 // loop_body
      %s35 = ssub.s32 %s30, 1
      %s36 = ssub.s32 %s30, 2
      %s37 = sadd.s32 %s30, 1
      %s38 = ssub.s32 %s30, %s37
      %p39 = scmp.eq.s32.totalorder %s38, 0
      %s41 = sadd.s32 %s40, 1
      %s42 = scalar_select %p39, %s40, %s41
      %p45 = pneg %p39
      %p46 = scmp.eq.s32.totalorder %s30, 1
      %p47 = por %p45, %p46
      %p48 = scmp.ne.s32.totalorder %s40, %s43
      %p49 = scmp.eq.s32.totalorder %s30, 0
      %p50 = por %p48, %p49
      %p51 = scmp.ne.s32.totalorder %s40, %s43
      %p52 = scmp.eq.s32.totalorder %s35, 1
      %p53 = por %p51, %p52
      %p54 = scmp.ne.s32.totalorder %s43, %s44
      %p55 = scmp.eq.s32.totalorder %s35, 0
      %p56 = por %p54, %p55
      %p57 = scmp.ne.s32.totalorder %s43, %s44
      %p58 = scmp.eq.s32.totalorder %s36, 1
      %p59 = por %p57, %p58
      %p61 = scmp.ne.s32.totalorder %s44, %s60
      %p62 = scmp.eq.s32.totalorder %s36, 0
      %p63 = por %p61, %p62
      %s64 = ssub.s32 %s30, %s37
      %p65 = scmp.eq.s32.totalorder %s64, 0
      %s67 = sadd.s32 %s66, 1
      %s68 = scalar_select %p65, %s66, %s67
      %p71 = pneg %p65
      %p72 = scmp.eq.s32.totalorder %s30, 1
      %p73 = por %p71, %p72
      %p74 = scmp.ne.s32.totalorder %s66, %s69
      %p75 = scmp.eq.s32.totalorder %s30, 0
      %p76 = por %p74, %p75
      %p77 = scmp.ne.s32.totalorder %s66, %s69
      %p78 = scmp.eq.s32.totalorder %s35, 1
      %p79 = por %p77, %p78
      %p80 = scmp.ne.s32.totalorder %s69, %s70
      %p81 = scmp.eq.s32.totalorder %s35, 0
      %p82 = por %p80, %p81
      %p83 = scmp.ne.s32.totalorder %s69, %s70
      %p84 = scmp.eq.s32.totalorder %s36, 1
      %p85 = por %p83, %p84
      %p87 = scmp.ne.s32.totalorder %s70, %s86
      %p88 = scmp.eq.s32.totalorder %s36, 0
      %p89 = por %p87, %p88
      %s91 = sadd.s32 %s90, 1
      %p94 = scmp.eq.s32.totalorder %s30, 1
      %p95 = scmp.ne.s32.totalorder %s90, %s92
      %p96 = scmp.eq.s32.totalorder %s30, 0
      %p97 = por %p95, %p96
      %p98 = scmp.ne.s32.totalorder %s90, %s92
      %p99 = scmp.eq.s32.totalorder %s35, 1
      %p100 = por %p98, %p99
      %p101 = scmp.ne.s32.totalorder %s92, %s93
      %p102 = scmp.eq.s32.totalorder %s35, 0
      %p103 = por %p101, %p102
      %p104 = scmp.ne.s32.totalorder %s92, %s93
      %p105 = scmp.eq.s32.totalorder %s36, 1
      %p106 = por %p104, %p105
      %p108 = scmp.ne.s32.totalorder %s93, %s107
      %p109 = scmp.eq.s32.totalorder %s36, 0
      %p110 = por %p108, %p109
      %s112 = sadd.s32 %s111, 1
      %p115 = scmp.eq.s32.totalorder %s30, 1
      %p116 = scmp.ne.s32.totalorder %s111, %s113
      %p117 = scmp.eq.s32.totalorder %s30, 0
      %p118 = por %p116, %p117
      %p119 = scmp.ne.s32.totalorder %s111, %s113
      %p120 = scmp.eq.s32.totalorder %s35, 1
      %p121 = por %p119, %p120
      %p122 = scmp.ne.s32.totalorder %s113, %s114
      %p123 = scmp.eq.s32.totalorder %s35, 0
      %p124 = por %p122, %p123
      %p125 = scmp.ne.s32.totalorder %s113, %s114
      %p126 = scmp.eq.s32.totalorder %s36, 1
      %p127 = por %p125, %p126
      %p129 = scmp.ne.s32.totalorder %s114, %s128
      %p130 = scmp.eq.s32.totalorder %s36, 0
      %p131 = por %p129, %p130
      %s133 = sadd.s32 %s132, 1
      %p136 = scmp.eq.s32.totalorder %s30, 1
      %p137 = scmp.ne.s32.totalorder %s132, %s134
      %p138 = scmp.eq.s32.totalorder %s30, 0
      %p139 = por %p137, %p138
      %p140 = scmp.ne.s32.totalorder %s132, %s134
      %p141 = scmp.eq.s32.totalorder %s35, 1
      %p142 = por %p140, %p141
      %p143 = scmp.ne.s32.totalorder %s134, %s135
      %p144 = scmp.eq.s32.totalorder %s35, 0
      %p145 = por %p143, %p144
      %p146 = scmp.ne.s32.totalorder %s134, %s135
      %p147 = scmp.eq.s32.totalorder %s36, 1
      %p148 = por %p146, %p147
      %p150 = scmp.ne.s32.totalorder %s135, %s149
      %p151 = scmp.eq.s32.totalorder %s36, 0
      %p152 = por %p150, %p151
      %s154 = sadd.s32 %s153, 1
      %p157 = scmp.eq.s32.totalorder %s30, 1
      %p158 = scmp.ne.s32.totalorder %s153, %s155
      %p159 = scmp.eq.s32.totalorder %s30, 0
      %p160 = por %p158, %p159
      %p161 = scmp.ne.s32.totalorder %s153, %s155
      %p162 = scmp.eq.s32.totalorder %s35, 1
      %p163 = por %p161, %p162
      %p164 = scmp.ne.s32.totalorder %s155, %s156
      %p165 = scmp.eq.s32.totalorder %s35, 0
      %p166 = por %p164, %p165
      %p167 = scmp.ne.s32.totalorder %s155, %s156
      %p168 = scmp.eq.s32.totalorder %s36, 1
      %p169 = por %p167, %p168
      %p171 = scmp.ne.s32.totalorder %s156, %s170
      %p172 = scmp.eq.s32.totalorder %s36, 0
      %p173 = por %p171, %p172
      %s175 = sadd.s32 %s174, 1
      %p178 = scmp.eq.s32.totalorder %s30, 1
      %p179 = scmp.ne.s32.totalorder %s174, %s176
      %p180 = scmp.eq.s32.totalorder %s30, 0
      %p181 = por %p179, %p180
      %p182 = scmp.ne.s32.totalorder %s174, %s176
      %p183 = scmp.eq.s32.totalorder %s35, 1
      %p184 = por %p182, %p183
      %p185 = scmp.ne.s32.totalorder %s176, %s177
      %p186 = scmp.eq.s32.totalorder %s35, 0
      %p187 = por %p185, %p186
      %p188 = scmp.ne.s32.totalorder %s176, %s177
      %p189 = scmp.eq.s32.totalorder %s36, 1
      %p190 = por %p188, %p189
      %p192 = scmp.ne.s32.totalorder %s177, %s191
      %p193 = scmp.eq.s32.totalorder %s36, 0
      %p194 = por %p192, %p193
      %s196 = sadd.s32 %s195, 1
      %p199 = scmp.eq.s32.totalorder %s30, 1
      %p200 = scmp.ne.s32.totalorder %s195, %s197
      %p201 = scmp.eq.s32.totalorder %s30, 0
      %p202 = por %p200, %p201
      %p203 = scmp.ne.s32.totalorder %s195, %s197
      %p204 = scmp.eq.s32.totalorder %s35, 1
      %p205 = por %p203, %p204
      %p206 = scmp.ne.s32.totalorder %s197, %s198
      %p207 = scmp.eq.s32.totalorder %s35, 0
      %p208 = por %p206, %p207
      %p209 = scmp.ne.s32.totalorder %s197, %s198
      %p210 = scmp.eq.s32.totalorder %s36, 1
      %p211 = por %p209, %p210
      %p213 = scmp.ne.s32.totalorder %s198, %s212
      %p214 = scmp.eq.s32.totalorder %s36, 0
      %p215 = por %p213, %p214
      %s217 = sadd.s32 %s216, 1
      %p220 = scmp.eq.s32.totalorder %s30, 1
      %p221 = scmp.ne.s32.totalorder %s216, %s218
      %p222 = scmp.eq.s32.totalorder %s30, 0
      %p223 = por %p221, %p222
      %p224 = scmp.ne.s32.totalorder %s216, %s218
      %p225 = scmp.eq.s32.totalorder %s35, 1
      %p226 = por %p224, %p225
      %p227 = scmp.ne.s32.totalorder %s218, %s219
      %p228 = scmp.eq.s32.totalorder %s35, 0
      %p229 = por %p227, %p228
      %p230 = scmp.ne.s32.totalorder %s218, %s219
      %p231 = scmp.eq.s32.totalorder %s36, 1
      %p232 = por %p230, %p231
      %p234 = scmp.ne.s32.totalorder %s219, %s233
      %p235 = scmp.eq.s32.totalorder %s36, 0
      %p236 = por %p234, %p235
      %s238 = sadd.s32 %s237, 1
      %p241 = scmp.eq.s32.totalorder %s30, 1
      %p242 = scmp.ne.s32.totalorder %s237, %s239
      %p243 = scmp.eq.s32.totalorder %s30, 0
      %p244 = por %p242, %p243
      %p245 = scmp.ne.s32.totalorder %s237, %s239
      %p246 = scmp.eq.s32.totalorder %s35, 1
      %p247 = por %p245, %p246
      %p248 = scmp.ne.s32.totalorder %s239, %s240
      %p249 = scmp.eq.s32.totalorder %s35, 0
      %p250 = por %p248, %p249
      %p251 = scmp.ne.s32.totalorder %s239, %s240
      %p252 = scmp.eq.s32.totalorder %s36, 1
      %p253 = por %p251, %p252
      %p255 = scmp.ne.s32.totalorder %s240, %s254
      %p256 = scmp.eq.s32.totalorder %s36, 0
      %p257 = por %p255, %p256
      %s259 = sadd.s32 %s258, 1
      %p262 = scmp.eq.s32.totalorder %s30, 1
      %p263 = scmp.ne.s32.totalorder %s258, %s260
      %p264 = scmp.eq.s32.totalorder %s30, 0
      %p265 = por %p263, %p264
      %p266 = scmp.ne.s32.totalorder %s258, %s260
      %p267 = scmp.eq.s32.totalorder %s35, 1
      %p268 = por %p266, %p267
      %p269 = scmp.ne.s32.totalorder %s260, %s261
      %p270 = scmp.eq.s32.totalorder %s35, 0
      %p271 = por %p269, %p270
      %p272 = scmp.ne.s32.totalorder %s260, %s261
      %p273 = scmp.eq.s32.totalorder %s36, 1
      %p274 = por %p272, %p273
      %p276 = scmp.ne.s32.totalorder %s261, %s275
      %p277 = scmp.eq.s32.totalorder %s36, 0
      %p278 = por %p276, %p277
      %s280 = sadd.s32 %s279, 1
      %p283 = scmp.eq.s32.totalorder %s30, 1
      %p284 = scmp.ne.s32.totalorder %s279, %s281
      %p285 = scmp.eq.s32.totalorder %s30, 0
      %p286 = por %p284, %p285
      %p287 = scmp.ne.s32.totalorder %s279, %s281
      %p288 = scmp.eq.s32.totalorder %s35, 1
      %p289 = por %p287, %p288
      %p290 = scmp.ne.s32.totalorder %s281, %s282
      %p291 = scmp.eq.s32.totalorder %s35, 0
      %p292 = por %p290, %p291
      %p293 = scmp.ne.s32.totalorder %s281, %s282
      %p294 = scmp.eq.s32.totalorder %s36, 1
      %p295 = por %p293, %p294
      %p297 = scmp.ne.s32.totalorder %s282, %s296
      %p298 = scmp.eq.s32.totalorder %s36, 0
      %p299 = por %p297, %p298
      %s301 = sadd.s32 %s300, 1
      %p304 = scmp.eq.s32.totalorder %s30, 1
      %p305 = scmp.ne.s32.totalorder %s300, %s302
      %p306 = scmp.eq.s32.totalorder %s30, 0
      %p307 = por %p305, %p306
      %p308 = scmp.ne.s32.totalorder %s300, %s302
      %p309 = scmp.eq.s32.totalorder %s35, 1
      %p310 = por %p308, %p309
      %p311 = scmp.ne.s32.totalorder %s302, %s303
      %p312 = scmp.eq.s32.totalorder %s35, 0
      %p313 = por %p311, %p312
      %p314 = scmp.ne.s32.totalorder %s302, %s303
      %p315 = scmp.eq.s32.totalorder %s36, 1
      %p316 = por %p314, %p315
      %p318 = scmp.ne.s32.totalorder %s303, %s317
      %p319 = scmp.eq.s32.totalorder %s36, 0
      %p320 = por %p318, %p319
      %s322 = sadd.s32 %s321, 1
      %p325 = scmp.eq.s32.totalorder %s30, 1
      %p326 = scmp.ne.s32.totalorder %s321, %s323
      %p327 = scmp.eq.s32.totalorder %s30, 0
      %p328 = por %p326, %p327
      %p329 = scmp.ne.s32.totalorder %s321, %s323
      %p330 = scmp.eq.s32.totalorder %s35, 1
      %p331 = por %p329, %p330
      %p332 = scmp.ne.s32.totalorder %s323, %s324
      %p333 = scmp.eq.s32.totalorder %s35, 0
      %p334 = por %p332, %p333
      %p335 = scmp.ne.s32.totalorder %s323, %s324
      %p336 = scmp.eq.s32.totalorder %s36, 1
      %p337 = por %p335, %p336
      %p339 = scmp.ne.s32.totalorder %s324, %s338
      %p340 = scmp.eq.s32.totalorder %s36, 0
      %p341 = por %p339, %p340
      %s343 = sadd.s32 %s342, 1
      %p346 = scmp.eq.s32.totalorder %s30, 1
      %p347 = scmp.ne.s32.totalorder %s342, %s344
      %p348 = scmp.eq.s32.totalorder %s30, 0
      %p349 = por %p347, %p348
      %p350 = scmp.ne.s32.totalorder %s342, %s344
      %p351 = scmp.eq.s32.totalorder %s35, 1
      %p352 = por %p350, %p351
      %p353 = scmp.ne.s32.totalorder %s344, %s345
      %p354 = scmp.eq.s32.totalorder %s35, 0
      %p355 = por %p353, %p354
      %p356 = scmp.ne.s32.totalorder %s344, %s345
      %p357 = scmp.eq.s32.totalorder %s36, 1
      %p358 = por %p356, %p357
      %p360 = scmp.ne.s32.totalorder %s345, %s359
      %p361 = scmp.eq.s32.totalorder %s36, 0
      %p362 = por %p360, %p361
      %s363 = ssub.s32 %s30, %s37
      %p364 = scmp.eq.s32.totalorder %s363, 0
      %s366 = sadd.s32 %s365, 1
      %s367 = scalar_select %p364, %s365, %s366
      %p370 = pneg %p364
      %p371 = scmp.eq.s32.totalorder %s30, 1
      %p372 = por %p370, %p371
      %p373 = scmp.ne.s32.totalorder %s365, %s368
      %p374 = scmp.eq.s32.totalorder %s30, 0
      %p375 = por %p373, %p374
      %p376 = scmp.ne.s32.totalorder %s365, %s368
      %p377 = scmp.eq.s32.totalorder %s35, 1
      %p378 = por %p376, %p377
      %p379 = scmp.ne.s32.totalorder %s368, %s369
      %p380 = scmp.eq.s32.totalorder %s35, 0
      %p381 = por %p379, %p380
      %p382 = scmp.ne.s32.totalorder %s368, %s369
      %p383 = scmp.eq.s32.totalorder %s36, 1
      %p384 = por %p382, %p383
      %p386 = scmp.ne.s32.totalorder %s369, %s385
      %p387 = scmp.eq.s32.totalorder %s36, 0
      %p388 = por %p386, %p387
      %p389 = scmp.le.s32.totalorder 1, %s30
      %p390 = scmp.lt.s32.totalorder %s30, 3
      %p391 = pnand %p389, %p390
      %p392 = pneg %p391
      // Predicated region
      $region9: #{tpu_custom_call.1} parent=5 // pred_check
        _
      $region10: #{tpu_custom_call.1} parent=5 // pred_check_branch
        %394 = sbr.rel (%p391) target = $region12
      $region11: #{tpu_custom_call.1} parent=5 // pred_region
        %s395 = ssub.s32 %s30, 1
        // Predicated region
        $region13: #{tpu_custom_call.1} parent=11 // pred_check
          %p396 = pneg %p103
        $region14: #{tpu_custom_call.1} parent=11 // pred_check_branch
          %398 = sbr.rel (%p396) target = $region16
        $region15: #{tpu_custom_call.1} parent=11 // pred_region
          _
        $region16: #{tpu_custom_call.1} parent=11 // pred_fallthru
          _
        // Predicated region
        $region17: #{tpu_custom_call.1} parent=11 // pred_check
          %p399 = pneg %p124
        $region18: #{tpu_custom_call.1} parent=11 // pred_check_branch
          %401 = sbr.rel (%p399) target = $region20
        $region19: #{tpu_custom_call.1} parent=11 // pred_region
          _
        $region20: #{tpu_custom_call.1} parent=11 // pred_fallthru
          _
        // Predicated region
        $region21: #{tpu_custom_call.1} parent=11 // pred_check
          %p402 = pneg %p145
        $region22: #{tpu_custom_call.1} parent=11 // pred_check_branch
          %404 = sbr.rel (%p402) target = $region24
        $region23: #{tpu_custom_call.1} parent=11 // pred_region
          _
        $region24: #{tpu_custom_call.1} parent=11 // pred_fallthru
          _
        // Predicated region
        $region25: #{tpu_custom_call.1} parent=11 // pred_check
          %p405 = pneg %p166
        $region26: #{tpu_custom_call.1} parent=11 // pred_check_branch
          %407 = sbr.rel (%p405) target = $region28
        $region27: #{tpu_custom_call.1} parent=11 // pred_region
          _
        $region28: #{tpu_custom_call.1} parent=11 // pred_fallthru
          _
        // Predicated region
        $region29: #{tpu_custom_call.1} parent=11 // pred_check
          %p408 = pneg %p187
        $region30: #{tpu_custom_call.1} parent=11 // pred_check_branch
          %410 = sbr.rel (%p408) target = $region32
        $region31: #{tpu_custom_call.1} parent=11 // pred_region
          _
        $region32: #{tpu_custom_call.1} parent=11 // pred_fallthru
          _
        // Predicated region
        $region33: #{tpu_custom_call.1} parent=11 // pred_check
          %p411 = pneg %p208
        $region34: #{tpu_custom_call.1} parent=11 // pred_check_branch
          %413 = sbr.rel (%p411) target = $region36
        $region35: #{tpu_custom_call.1} parent=11 // pred_region
          _
        $region36: #{tpu_custom_call.1} parent=11 // pred_fallthru
          _
        // Predicated region
        $region37: #{tpu_custom_call.1} parent=11 // pred_check
          %p414 = pneg %p229
        $region38: #{tpu_custom_call.1} parent=11 // pred_check_branch
          %416 = sbr.rel (%p414) target = $region40
        $region39: #{tpu_custom_call.1} parent=11 // pred_region
          _
        $region40: #{tpu_custom_call.1} parent=11 // pred_fallthru
          _
        // Predicated region
        $region41: #{tpu_custom_call.1} parent=11 // pred_check
          %p417 = pneg %p250
        $region42: #{tpu_custom_call.1} parent=11 // pred_check_branch
          %419 = sbr.rel (%p417) target = $region44
        $region43: #{tpu_custom_call.1} parent=11 // pred_region
          _
        $region44: #{tpu_custom_call.1} parent=11 // pred_fallthru
          _
        // Predicated region
        $region45: #{tpu_custom_call.1} parent=11 // pred_check
          %p420 = pneg %p271
        $region46: #{tpu_custom_call.1} parent=11 // pred_check_branch
          %422 = sbr.rel (%p420) target = $region48
        $region47: #{tpu_custom_call.1} parent=11 // pred_region
          _
        $region48: #{tpu_custom_call.1} parent=11 // pred_fallthru
          _
        // Predicated region
        $region49: #{tpu_custom_call.1} parent=11 // pred_check
          %p423 = pneg %p292
        $region50: #{tpu_custom_call.1} parent=11 // pred_check_branch
          %425 = sbr.rel (%p423) target = $region52
        $region51: #{tpu_custom_call.1} parent=11 // pred_region
          _
        $region52: #{tpu_custom_call.1} parent=11 // pred_fallthru
          _
        // Predicated region
        $region53: #{tpu_custom_call.1} parent=11 // pred_check
          %p426 = pneg %p313
        $region54: #{tpu_custom_call.1} parent=11 // pred_check_branch
          %428 = sbr.rel (%p426) target = $region56
        $region55: #{tpu_custom_call.1} parent=11 // pred_region
          _
        $region56: #{tpu_custom_call.1} parent=11 // pred_fallthru
          _
        // Predicated region
        $region57: #{tpu_custom_call.1} parent=11 // pred_check
          %p429 = pneg %p334
        $region58: #{tpu_custom_call.1} parent=11 // pred_check_branch
          %431 = sbr.rel (%p429) target = $region60
        $region59: #{tpu_custom_call.1} parent=11 // pred_region
          _
        $region60: #{tpu_custom_call.1} parent=11 // pred_fallthru
          _
        // Predicated region
        $region61: #{tpu_custom_call.1} parent=11 // pred_check
          %p432 = pneg %p355
        $region62: #{tpu_custom_call.1} parent=11 // pred_check_branch
          %434 = sbr.rel (%p432) target = $region64
        $region63: #{tpu_custom_call.1} parent=11 // pred_region
          _
        $region64: #{tpu_custom_call.1} parent=11 // pred_fallthru
          _
      $region12: #{tpu_custom_call.1} parent=5 // pred_fallthru
        _
      %p435 = scmp.lt.s32.totalorder %s30, 2
      // Predicated region
      $region65: #{tpu_custom_call.1} parent=5 // pred_check
        %p436 = pneg %p435
      $region66: #{tpu_custom_call.1} parent=5 // pred_check_branch
        %438 = sbr.rel (%p436) target = $region68
      $region67: #{tpu_custom_call.1} parent=5 // pred_region
        // Predicated region
        $region69: #{tpu_custom_call.1} parent=67 // pred_check
          %p439 = pneg %p50
        $region70: #{tpu_custom_call.1} parent=67 // pred_check_branch
          %441 = sbr.rel (%p439) target = $region72
        $region71: #{tpu_custom_call.1} parent=67 // pred_region
          %s442 = sand.u32 %s40, 1
          %s443 = scalar_lea.sflag [#allocation3], %s442
          %s444 = sand.u32 %s40, 1
          %s445 = smul.addr %s444, 4
          %s446 = scalar_lea.vmem [#allocation2], %s445
          %448 = vsyncadd %s443, 0
          %s449 = smul.addr %s30, 4
          %s450 = scalar_lea.hbm %s0, %s449
          %s452 = sshll.u32 %s450, 4
          %s453 = int_to_ptr.hbm [resolvable:$true] %s452
          %s454 = sshll.u32 %s446, 4
          %s455 = int_to_ptr.vmem [resolvable:$true] %s454
          %457 = dma.hbm_to_vmem [thread:$0]  %s453, 64, %s455, %s443
        $region72: #{tpu_custom_call.1} parent=67 // pred_fallthru
          _
        // Predicated region
        $region73: #{tpu_custom_call.1} parent=67 // pred_check
          %p458 = pneg %p76
        $region74: #{tpu_custom_call.1} parent=67 // pred_check_branch
          %460 = sbr.rel (%p458) target = $region76
        $region75: #{tpu_custom_call.1} parent=67 // pred_region
          %s461 = sand.u32 %s66, 1
          %s462 = scalar_lea.sflag [#allocation6], %s461
          %s463 = sand.u32 %s66, 1
          %s464 = scalar_lea.vmem [#allocation5], %s463
          %466 = vsyncadd %s462, 0
          %s467 = scalar_lea.hbm %s1, %s30
          %s469 = sshll.u32 %s467, 4
          %s470 = int_to_ptr.hbm [resolvable:$true] %s469
          %s471 = sshll.u32 %s464, 4
          %s472 = int_to_ptr.vmem [resolvable:$true] %s471
          %474 = dma.hbm_to_vmem [thread:$0]  %s470, 16, %s472, %s462
        $region76: #{tpu_custom_call.1} parent=67 // pred_fallthru
          _
      $region68: #{tpu_custom_call.1} parent=5 // pred_fallthru
        _
      %p475 = scmp.le.s32.totalorder 1, %s30
      %p476 = scmp.lt.s32.totalorder %s30, 3
      %p477 = pnand %p475, %p476
      %p478 = pneg %p477
      // Predicated region
      $region77: #{tpu_custom_call.1} parent=5 // pred_check
        _
      $region78: #{tpu_custom_call.1} parent=5 // pred_check_branch
        %480 = sbr.rel (%p477) target = $region80
      $region79: #{tpu_custom_call.1} parent=5 // pred_region
        %s481 = ssub.s32 %s30, 1
        %s482 = sand.u32 %s43, 1
        %s483 = scalar_lea.sflag [#allocation3], %s482
        %s484 = sand.u32 %s43, 1
        %s485 = smul.addr %s484, 4
        %s486 = scalar_lea.vmem [#allocation2], %s485
        // Predicated region
        $region81: #{tpu_custom_call.1} parent=79 // pred_check
          %p487 = pneg %p56
        $region82: #{tpu_custom_call.1} parent=79 // pred_check_branch
          %489 = sbr.rel (%p487) target = $region84
        $region83: #{tpu_custom_call.1} parent=79 // pred_region
          %491 = dma.done %s483, 64
        $region84: #{tpu_custom_call.1} parent=79 // pred_fallthru
          _
        %s492 = sand.u32 %s69, 1
        %s493 = scalar_lea.sflag [#allocation6], %s492
        %s494 = sand.u32 %s69, 1
        %s495 = scalar_lea.vmem [#allocation5], %s494
        // Predicated region
        $region85: #{tpu_custom_call.1} parent=79 // pred_check
          %p496 = pneg %p82
        $region86: #{tpu_custom_call.1} parent=79 // pred_check_branch
          %498 = sbr.rel (%p496) target = $region88
        $region87: #{tpu_custom_call.1} parent=79 // pred_region
          %500 = dma.done %s493, 16
        $region88: #{tpu_custom_call.1} parent=79 // pred_fallthru
          _
        %s501 = sand.u32 %s43, 1
        %s502 = scalar_lea.sflag [#allocation3], %s501
        %s503 = sand.u32 %s43, 1
        %s504 = smul.addr %s503, 4
        %s505 = scalar_lea.vmem [#allocation2], %s504
        %p506 = pneg %p56
        %p507 = pneg %p53
        %s508 = sand.u32 %s69, 1
        %s509 = scalar_lea.sflag [#allocation6], %s508
        %s510 = sand.u32 %s69, 1
        %s511 = scalar_lea.vmem [#allocation5], %s510
        %p512 = pneg %p82
        %p513 = pneg %p79
        %p514 = pneg %p103
        %p515 = pneg %p100
        %p516 = pneg %p124
        %p517 = pneg %p121
        %p518 = pneg %p145
        %p519 = pneg %p142
        %p520 = pneg %p166
        %p521 = pneg %p163
        %p522 = pneg %p187
        %p523 = pneg %p184
        %p524 = pneg %p208
        %p525 = pneg %p205
        %p526 = pneg %p229
        %p527 = pneg %p226
        %p528 = pneg %p250
        %p529 = pneg %p247
        %p530 = pneg %p271
        %p531 = pneg %p268
        %p532 = pneg %p292
        %p533 = pneg %p289
        %p534 = pneg %p313
        %p535 = pneg %p310
        %p536 = pneg %p334
        %p537 = pneg %p331
        %p538 = pneg %p355
        %p539 = pneg %p352
        %p540 = pneg %p381
        %p541 = pneg %p378
        %s542 = sand.u32 %s368, 1
        %s543 = scalar_lea.sflag [#allocation4], %s542
        %s544 = sand.u32 %s368, 1
        %s545 = smul.addr %s544, 4
        %s546 = scalar_lea.vmem [#allocation7], %s545
        %v548 = vld [vmem:[%s486] sm:$0xf]
        %v549 = vunpack.c.l.bf16 %v548
        %v550 = vld [vmem:[%s2] sm:$0xf]
        %v551 = vld [vmem:[%s2 + $0x4] sm:$0xf]
        %v552 = vld [vmem:[%s2 + $0x8] sm:$0xf]
        %v553 = vld [vmem:[%s2 + $0xc] sm:$0xf]
        %v558 = vunpack.c.l.b16 %v550
        %v559 = vunpack.c.l.b16 %v551
        %v560 = vunpack.c.l.b16 %v552
        %v561 = vunpack.c.l.b16 %v553
        %v562 = vpack.c.b16 %v559, %v558
        %v563 = vpack.c.b16 %v561, %v560
        %vm566 = vcmask 261120
        %v568 = vsel %vm566, %v548, 0
        %570 = vmatpush.bf16.msra.mxu0 0
        %571 = vmatpush.bf16.msra.mxu0 0
        %572 = vmatpush.bf16.msra.mxu0 0
        %573 = vmatpush.bf16.msra.mxu0 0
        %574 = vmatpush.bf16.msra.mxu0 0
        %575 = vmatpush.bf16.msra.mxu0 0
        %576 = vmatpush.bf16.msra.mxu0 %v563
        %577 = vmatpush.bf16.msra.mxu0 %v562
        %578 = vmatmul.bf16.gmra.mxu0 %v568
        %v579 = vpop.f32.mrf.mxu0
        %v580 = vadd.f32 0.0, %v579
        %v581 = vpop.f32.mrf.mxu0
        %582 = vdwg.mxu0
        %v583 = vpack.c.bf16 %v580, %v580
        %v584 = vld [vmem:[%s3] sm:$0xf]
        %v585 = vld [vmem:[%s3 + $0x4] sm:$0xf]
        %v586 = vld [vmem:[%s3 + $0x8] sm:$0xf]
        %v587 = vld [vmem:[%s3 + $0xc] sm:$0xf]
        %v592 = vunpack.c.l.b16 %v584
        %v593 = vunpack.c.l.b16 %v585
        %v594 = vunpack.c.l.b16 %v586
        %v595 = vunpack.c.l.b16 %v587
        %v596 = vpack.c.b16 %v593, %v592
        %v597 = vpack.c.b16 %v595, %v594
        %600 = vmatpush.bf16.msra.mxu0 0
        %601 = vmatpush.bf16.msra.mxu0 0
        %602 = vmatpush.bf16.msra.mxu0 0
        %603 = vmatpush.bf16.msra.mxu0 0
        %604 = vmatpush.bf16.msra.mxu0 0
        %605 = vmatpush.bf16.msra.mxu0 0
        %606 = vmatpush.bf16.msra.mxu0 %v597
        %607 = vmatpush.bf16.msra.mxu0 %v596
        %608 = vmatmul.bf16.gmra.mxu0 %v568
        %v609 = vpop.f32.mrf.mxu0
        %v610 = vadd.f32 0.0, %v609
        %v611 = vpop.f32.mrf.mxu0
        %612 = vdwg.mxu0
        %v613 = vpack.c.bf16 %v610, %v610
        %v614 = vld [vmem:[%s4] sm:$0xf]
        %v615 = vld [vmem:[%s4 + $0x4] sm:$0xf]
        %v616 = vld [vmem:[%s4 + $0x8] sm:$0xf]
        %v617 = vld [vmem:[%s4 + $0xc] sm:$0xf]
        %v622 = vunpack.c.l.b16 %v614
        %v623 = vunpack.c.l.b16 %v615
        %v624 = vunpack.c.l.b16 %v616
        %v625 = vunpack.c.l.b16 %v617
        %v626 = vpack.c.b16 %v623, %v622
        %v627 = vpack.c.b16 %v625, %v624
        %630 = vmatpush.bf16.msra.mxu0 0
        %631 = vmatpush.bf16.msra.mxu0 0
        %632 = vmatpush.bf16.msra.mxu0 0
        %633 = vmatpush.bf16.msra.mxu0 0
        %634 = vmatpush.bf16.msra.mxu0 0
        %635 = vmatpush.bf16.msra.mxu0 0
        %636 = vmatpush.bf16.msra.mxu0 %v627
        %637 = vmatpush.bf16.msra.mxu0 %v626
        %638 = vmatmul.bf16.gmra.mxu0 %v568
        %v639 = vpop.f32.mrf.mxu0
        %v640 = vadd.f32 0.0, %v639
        %v641 = vpop.f32.mrf.mxu0
        %642 = vdwg.mxu0
        %v643 = vpack.c.bf16 %v640, %v640
        %v644 = vld [vmem:[%s495] sm:$0x1]
        %vm645 = vcmp.eq.s32.totalorder %v644, 0
        %v646 = vsel %vm645, -1.767767e+19, 0.0
        %v648 = vperm.slane %v646, 0
        %vm650 = vcmask 130048
        %v652 = vsel %vm650, %v583, 0
        %v655 = vsel %vm650, %v613, 0
        %657 = vmatpush.bf16.xpose.msra.mxu0 0
        %658 = vmatpush.bf16.xpose.msra.mxu0 0
        %659 = vmatpush.bf16.xpose.msra.mxu0 0
        %660 = vmatpush.bf16.xpose.msra.mxu0 0
        %661 = vmatpush.bf16.xpose.msra.mxu0 0
        %662 = vmatpush.bf16.xpose.msra.mxu0 0
        %663 = vmatpush.bf16.xpose.msra.mxu0 0
        %664 = vmatpush.bf16.xpose.msra.mxu0 %v655
        %665 = vmatmul.bf16.gmra.mxu0 %v652
        %v666 = vpop.f32.mrf.mxu0
        %v667 = vadd.f32 %v648, %v666
        %v668 = vpop.f32.mrf.mxu0
        %669 = vdwg.mxu0
        %vm670 = vcmask 64512
        %v671 = vsel %vm670, %v667, -inf
        %672 = vmax.xlane.f32.xlu0 %v671
        %v673 = vpop.xlane.xlu0 %672
        %v674 = vsub.f32 %v667, %v673
        %v675 = vmul.f32 %v674, 1.442695
        %v676 = vpow.pop %v675
        %v677 = vsel %vm670, %v676, 0.0
        %678 = vadd.xlane.f32.xlu0 %v677
        %v679 = vpop.xlane.xlu0 %678
        %v680 = vrcp.pop %v679
        %v681 = vmul.f32 %v676, %v680
        %v682 = vpack.c.bf16 %v681, %v681
        %v684 = vsel %vm670, %v682, 0
        %vm686 = vcmask 1043456
        %v688 = vsel %vm686, %v643, 0
        %690 = vmatpush.bf16.msra.mxu0 0
        %691 = vmatpush.bf16.msra.mxu0 0
        %692 = vmatpush.bf16.msra.mxu0 0
        %693 = vmatpush.bf16.msra.mxu0 0
        %694 = vmatpush.bf16.msra.mxu0 0
        %695 = vmatpush.bf16.msra.mxu0 0
        %696 = vmatpush.bf16.msra.mxu0 0
        %697 = vmatpush.bf16.msra.mxu0 %v688
        %698 = vmatmul.bf16.gmra.mxu0 %v684
        %v699 = vpop.f32.mrf.mxu0
        %v700 = vadd.f32 0.0, %v699
        %v701 = vpop.f32.mrf.mxu0
        %702 = vdwg.mxu0
        %v703 = vpack.c.bf16 %v700, %v700
        %v705 = vunpack.c.l.b16 %v583
        %v706 = vpack.c.b16 %v705, %v705
        %707 = vrot.lane.b32.xlu0 %v706, 112
        %v708 = vpop.permute.xlu0 %707
        %v710 = vunpack.c.l.b16 %v613
        %v711 = vpack.c.b16 %v710, %v710
        %712 = vrot.lane.b32.xlu0 %v711, 112
        %v713 = vpop.permute.xlu0 %712
        %v715 = vsel %vm650, %v708, 0
        %v718 = vsel %vm650, %v713, 0
        %720 = vmatpush.bf16.xpose.msra.mxu0 0
        %721 = vmatpush.bf16.xpose.msra.mxu0 0
        %722 = vmatpush.bf16.xpose.msra.mxu0 0
        %723 = vmatpush.bf16.xpose.msra.mxu0 0
        %724 = vmatpush.bf16.xpose.msra.mxu0 0
        %725 = vmatpush.bf16.xpose.msra.mxu0 0
        %726 = vmatpush.bf16.xpose.msra.mxu0 0
        %727 = vmatpush.bf16.xpose.msra.mxu0 %v718
        %728 = vmatmul.bf16.gmra.mxu0 %v715
        %v729 = vpop.f32.mrf.mxu0
        %v730 = vadd.f32 %v648, %v729
        %v731 = vpop.f32.mrf.mxu0
        %732 = vdwg.mxu0
        %v733 = vsel %vm670, %v730, -inf
        %734 = vmax.xlane.f32.xlu0 %v733
        %v735 = vpop.xlane.xlu0 %734
        %v736 = vsub.f32 %v730, %v735
        %v737 = vmul.f32 %v736, 1.442695
        %v738 = vpow.pop %v737
        %v739 = vsel %vm670, %v738, 0.0
        %740 = vadd.xlane.f32.xlu0 %v739
        %v741 = vpop.xlane.xlu0 %740
        %v742 = vrcp.pop %v741
        %v743 = vmul.f32 %v738, %v742
        %v744 = vpack.c.bf16 %v743, %v743
        %v746 = vunpack.c.l.b16 %v643
        %v747 = vpack.c.b16 %v746, %v746
        %748 = vrot.lane.b32.xlu0 %v747, 112
        %v749 = vpop.permute.xlu0 %748
        %v751 = vsel %vm670, %v744, 0
        %v754 = vsel %vm686, %v749, 0
        %756 = vmatpush.bf16.msra.mxu0 0
        %757 = vmatpush.bf16.msra.mxu0 0
        %758 = vmatpush.bf16.msra.mxu0 0
        %759 = vmatpush.bf16.msra.mxu0 0
        %760 = vmatpush.bf16.msra.mxu0 0
        %761 = vmatpush.bf16.msra.mxu0 0
        %762 = vmatpush.bf16.msra.mxu0 0
        %763 = vmatpush.bf16.msra.mxu0 %v754
        %764 = vmatmul.bf16.gmra.mxu0 %v751
        %v765 = vpop.f32.mrf.mxu0
        %v766 = vadd.f32 0.0, %v765
        %v767 = vpop.f32.mrf.mxu0
        %768 = vdwg.mxu0
        %v769 = vpack.c.bf16 %v766, %v766
        %v771 = vunpack.c.l.b16 %v769
        %v772 = vpack.c.b16 %v771, %v771
        %773 = vrot.lane.b32.xlu0 %v772, 16
        %v774 = vpop.permute.xlu0 %773
        %v777 = vsel %vm650, %v703, %v774
        %v778 = vld [vmem:[%s5] sm:$0xf]
        %v779 = vld [vmem:[%s5 + $0x4] sm:$0xf]
        %v780 = vld [vmem:[%s5 + $0x8] sm:$0xf]
        %v781 = vld [vmem:[%s5 + $0xc] sm:$0xf]
        %v782 = vld [vmem:[%s6] sm:$0x1]
        %v784 = vperm.slane %v782, 0
        %v790 = vunpack.c.l.b16 %v778
        %v791 = vunpack.c.l.b16 %v779
        %v792 = vunpack.c.l.b16 %v780
        %v793 = vunpack.c.l.b16 %v781
        %v794 = vpack.c.b16 %v791, %v790
        %v795 = vpack.c.b16 %v793, %v792
        %v798 = vsel %vm566, %v777, 0
        %800 = vmatpush.bf16.msra.mxu0 0
        %801 = vmatpush.bf16.msra.mxu0 0
        %802 = vmatpush.bf16.msra.mxu0 0
        %803 = vmatpush.bf16.msra.mxu0 0
        %804 = vmatpush.bf16.msra.mxu0 0
        %805 = vmatpush.bf16.msra.mxu0 0
        %806 = vmatpush.bf16.msra.mxu0 %v795
        %807 = vmatpush.bf16.msra.mxu0 %v794
        %808 = vmatmul.bf16.gmra.mxu0 %v798
        %v809 = vpop.f32.mrf.mxu0
        %v810 = vadd.f32 %v784, %v809
        %v811 = vpop.f32.mrf.mxu0
        %812 = vdwg.mxu0
        %v813 = vadd.f32 %v810, %v549
        %v814 = vld [vmem:[%s7] sm:$0x1]
        %v815 = vld [vmem:[%s8] sm:$0x1]
        %v816 = vsel %vm566, %v813, 0.0
        %817 = vadd.xlane.f32.xlu0 %v816
        %v818 = vpop.xlane.xlu0 %817
        %v819 = vrcp.pop 32.0
        %v820 = vmul.f32 32.0, %v819
        %v821 = vsub.f32 1.0, %v820
        %v822 = vmul.f32 %v819, %v821
        %v823 = vadd.f32 %v819, %v822
        %vm824 = vweird.f32 %v819
        %v825 = vsel %vm824, %v819, %v823
        %v826 = vmul.f32 %v818, %v825
        %v827 = vsub.f32 %v813, %v826
        %v828 = vmul.f32 %v827, %v827
        %v829 = vsel %vm566, %v828, 0.0
        %830 = vadd.xlane.f32.xlu0 %v829
        %v831 = vpop.xlane.xlu0 %830
        %v832 = vmul.f32 %v831, %v825
        %v833 = vadd.f32 %v832, 1e-05
        %v834 = vrsqrt.pop %v833
        %v835 = vmul.f32 %v834, %v833
        %v836 = vmul.f32 %v835, %v834
        %v837 = vmul.f32 0.5, %v836
        %v838 = vsub.f32 1.5, %v837
        %v839 = vmul.f32 %v834, %v838
        %vm840 = vweird.f32 %v833
        %vm841 = vweird.f32 %v834
        %vm842 = vmor %vm840, %vm841
        %v843 = vsel %vm842, %v834, %v839
        %v844 = vmul.f32 %v827, %v843
        %v846 = vperm.slane %v814, 0
        %v848 = vmul.f32 %v844, %v846
        %v850 = vperm.slane %v815, 0
        %v852 = vadd.f32 %v848, %v850
        %v853 = vpack.c.bf16 %v852, %v852
        %v854 = vld [vmem:[%s9] sm:$0xf]
        %v855 = vld [vmem:[%s9 + $0x4] sm:$0xf]
        %v856 = vld [vmem:[%s9 + $0x8] sm:$0xf]
        %v857 = vld [vmem:[%s9 + $0xc] sm:$0xf]
        %v858 = vld [vmem:[%s10] sm:$0x1]
        %v860 = vperm.slane %v858, 0
        %v866 = vunpack.c.l.b16 %v854
        %v867 = vunpack.c.l.b16 %v855
        %v868 = vunpack.c.l.b16 %v856
        %v869 = vunpack.c.l.b16 %v857
        %v870 = vpack.c.b16 %v867, %v866
        %v871 = vpack.c.b16 %v869, %v868
        %v875 = vsel %vm566, %v853, 0
        %877 = vmatpush.bf16.msra.mxu0 0
        %878 = vmatpush.bf16.msra.mxu0 0
        %879 = vmatpush.bf16.msra.mxu0 0
        %880 = vmatpush.bf16.msra.mxu0 0
        %881 = vmatpush.bf16.msra.mxu0 0
        %882 = vmatpush.bf16.msra.mxu0 0
        %883 = vmatpush.bf16.msra.mxu0 %v871
        %884 = vmatpush.bf16.msra.mxu0 %v870
        %885 = vmatmul.bf16.gmra.mxu0 %v875
        %v886 = vpop.f32.mrf.mxu0
        %v887 = vadd.f32 %v860, %v886
        %v888 = vpop.f32.mrf.mxu0
        %889 = vdwg.mxu0
        %v890 = vmax.f32 %v887, 0.0
        %v891 = vpack.c.bf16 %v890, %v890
        %v892 = vld [vmem:[%s11] sm:$0xf]
        %v893 = vld [vmem:[%s11 + $0x4] sm:$0xf]
        %v894 = vld [vmem:[%s11 + $0x8] sm:$0xf]
        %v895 = vld [vmem:[%s11 + $0xc] sm:$0xf]
        %v896 = vld [vmem:[%s11 + $0x10] sm:$0xf]
        %v897 = vld [vmem:[%s11 + $0x14] sm:$0xf]
        %v898 = vld [vmem:[%s11 + $0x18] sm:$0xf]
        %v899 = vld [vmem:[%s11 + $0x1c] sm:$0xf]
        %v900 = vld [vmem:[%s11 + $0x20] sm:$0xf]
        %v901 = vld [vmem:[%s11 + $0x24] sm:$0xf]
        %v902 = vld [vmem:[%s11 + $0x28] sm:$0xf]
        %v903 = vld [vmem:[%s11 + $0x2c] sm:$0xf]
        %v904 = vld [vmem:[%s11 + $0x30] sm:$0xf]
        %v905 = vld [vmem:[%s11 + $0x34] sm:$0xf]
        %v906 = vld [vmem:[%s11 + $0x38] sm:$0xf]
        %v907 = vld [vmem:[%s11 + $0x3c] sm:$0xf]
        %v908 = vld [vmem:[%s12] sm:$0x1]
        %v910 = vperm.slane %v908, 0
        %v928 = vunpack.c.l.b16 %v892
        %v929 = vunpack.c.l.b16 %v893
        %v930 = vunpack.c.l.b16 %v894
        %v931 = vunpack.c.l.b16 %v895
        %v932 = vunpack.c.l.b16 %v896
        %v933 = vunpack.c.l.b16 %v897
        %v934 = vunpack.c.l.b16 %v898
        %v935 = vunpack.c.l.b16 %v899
        %v936 = vunpack.c.l.b16 %v900
        %v937 = vunpack.c.l.b16 %v901
        %v938 = vunpack.c.l.b16 %v902
        %v939 = vunpack.c.l.b16 %v903
        %v940 = vunpack.c.l.b16 %v904
        %v941 = vunpack.c.l.b16 %v905
        %v942 = vunpack.c.l.b16 %v906
        %v943 = vunpack.c.l.b16 %v907
        %v944 = vpack.c.b16 %v929, %v928
        %v945 = vpack.c.b16 %v931, %v930
        %v946 = vpack.c.b16 %v933, %v932
        %v947 = vpack.c.b16 %v935, %v934
        %v948 = vpack.c.b16 %v937, %v936
        %v949 = vpack.c.b16 %v939, %v938
        %v950 = vpack.c.b16 %v941, %v940
        %v951 = vpack.c.b16 %v943, %v942
        %960 = vmatpush.bf16.msra.mxu0 %v951
        %961 = vmatpush.bf16.msra.mxu0 %v950
        %962 = vmatpush.bf16.msra.mxu0 %v949
        %963 = vmatpush.bf16.msra.mxu0 %v948
        %964 = vmatpush.bf16.msra.mxu0 %v947
        %965 = vmatpush.bf16.msra.mxu0 %v946
        %966 = vmatpush.bf16.msra.mxu0 %v945
        %967 = vmatpush.bf16.msra.mxu0 %v944
        %968 = vmatmul.bf16.gmra.mxu0 %v891
        %v969 = vpop.f32.mrf.mxu0
        %v970 = vadd.f32 %v910, %v969
        %v971 = vpop.f32.mrf.mxu0
        %972 = vdwg.mxu0
        %v973 = vadd.f32 %v970, %v852
        %v974 = vld [vmem:[%s13] sm:$0x1]
        %v975 = vld [vmem:[%s14] sm:$0x1]
        %v976 = vsel %vm566, %v973, 0.0
        %977 = vadd.xlane.f32.xlu0 %v976
        %v978 = vpop.xlane.xlu0 %977
        %v979 = vmul.f32 %v978, %v825
        %v980 = vsub.f32 %v973, %v979
        %v981 = vmul.f32 %v980, %v980
        %v982 = vsel %vm566, %v981, 0.0
        %983 = vadd.xlane.f32.xlu0 %v982
        %v984 = vpop.xlane.xlu0 %983
        %v985 = vmul.f32 %v984, %v825
        %v986 = vadd.f32 %v985, 1e-05
        %v987 = vrsqrt.pop %v986
        %v988 = vmul.f32 %v987, %v986
        %v989 = vmul.f32 %v988, %v987
        %v990 = vmul.f32 0.5, %v989
        %v991 = vsub.f32 1.5, %v990
        %v992 = vmul.f32 %v987, %v991
        %vm993 = vweird.f32 %v986
        %vm994 = vweird.f32 %v987
        %vm995 = vmor %vm993, %vm994
        %v996 = vsel %vm995, %v987, %v992
        %v997 = vmul.f32 %v980, %v996
        %v999 = vperm.slane %v974, 0
        %v1001 = vmul.f32 %v997, %v999
        %v1003 = vperm.slane %v975, 0
        %v1005 = vadd.f32 %v1001, %v1003
        %v1006 = vpack.c.bf16 %v1005, %v1005
        %vm1007 = vcmask 257024
        %1008 = vst.msk [vmem:[%s546] sm:$0xf] %vm1007, %v1006
        %s1009 = sand.u32 %s368, 1
        %s1010 = scalar_lea.sflag [#allocation4], %s1009
        %s1011 = sand.u32 %s368, 1
        %s1012 = smul.addr %s1011, 4
        %s1013 = scalar_lea.vmem [#allocation7], %s1012
        // Predicated region
        $region89: #{tpu_custom_call.1} parent=79 // pred_check
          %p1014 = pneg %p378
        $region90: #{tpu_custom_call.1} parent=79 // pred_check_branch
          %1016 = sbr.rel (%p1014) target = $region92
        $region91: #{tpu_custom_call.1} parent=79 // pred_region
          %1018 = vsyncadd %s1010, 0
          %s1019 = smul.addr %s35, 4
          %s1020 = scalar_lea.hbm %s15, %s1019
          %s1022 = sshll.u32 %s1013, 4
          %s1023 = int_to_ptr.vmem [resolvable:$true] %s1022
          %s1024 = sshll.u32 %s1020, 4
          %s1025 = int_to_ptr.hbm [resolvable:$true] %s1024
          %1027 = dma.vmem_to_hbm [thread:$0]  %s1023, 64, %s1025, %s1010
        $region92: #{tpu_custom_call.1} parent=79 // pred_fallthru
          _
      $region80: #{tpu_custom_call.1} parent=5 // pred_fallthru
        _
      %p1028 = scmp.le.s32.totalorder 2, %s30
      // Predicated region
      $region93: #{tpu_custom_call.1} parent=5 // pred_check
        %p1029 = pneg %p1028
      $region94: #{tpu_custom_call.1} parent=5 // pred_check_branch
        %1031 = sbr.rel (%p1029) target = $region96
      $region95: #{tpu_custom_call.1} parent=5 // pred_region
        %s1032 = ssub.s32 %s30, 2
        // Predicated region
        $region97: #{tpu_custom_call.1} parent=95 // pred_check
          %p1033 = pneg %p384
        $region98: #{tpu_custom_call.1} parent=95 // pred_check_branch
          %1035 = sbr.rel (%p1033) target = $region100
        $region99: #{tpu_custom_call.1} parent=95 // pred_region
          %s1036 = sand.u32 %s369, 1
          %s1037 = scalar_lea.sflag [#allocation4], %s1036
          %s1038 = sand.u32 %s369, 1
          %s1039 = smul.addr %s1038, 4
          %s1040 = scalar_lea.vmem [#allocation7], %s1039
          %1042 = dma.done %s1037, 64
        $region100: #{tpu_custom_call.1} parent=95 // pred_fallthru
          _
      $region96: #{tpu_custom_call.1} parent=5 // pred_fallthru
        _
    $region6: #{tpu_custom_call.1} parent=1 // loop_footer
      %s34 = sadd.s32 1, %s30
    $region7: #{tpu_custom_call.1} parent=1 // loop_footer_branch
      %29 = sbr.rel target = $region3
    $region8: #{tpu_custom_call.1} parent=1 // loop_exit
      _
    %1043 = vsyncpa [#allocation3], 1
    %s1044 = scalar_lea.sflag [#allocation3], 1
    %1045 = vsyncpa %s1044, 1
    %1046 = vsyncpa [#allocation6], 1
    %s1047 = scalar_lea.sflag [#allocation6], 1
    %1048 = vsyncpa %s1047, 1
    %1049 = vsyncpa [#allocation4], 1
    %s1050 = scalar_lea.sflag [#allocation4], 1
    %1051 = vsyncpa %s1050, 1

</llo_original>
